<compile_context>
chip_gen: v6e
topology: v6e:2x2x1
jax: 0.10.0
libtpu: 0.0.40
codegen_flags: <defaults>
</compile_context>

<pallas_src>
import functools

import jax
import jax.numpy as jnp
from jax.experimental import pallas as pl
from jax.experimental.pallas import tpu as pltpu

N_NODES = 5
IN_CH = 16        # nn.Embedding(5, 16) -> node feature dim
HIDDEN = 8        # hidden_channels
OUT_CH = 8        # out_channels
HEADS = 4         # num_heads
NEG_SLOPE = 0.2   # GATConv default LeakyReLU slope
C1 = HEADS * HIDDEN   # 32


def _masked_softmax_rows(e, adj):
    """LeakyReLU + masked softmax over the last axis (rows always have a self-loop)."""
    e = jnp.where(e > 0, e, NEG_SLOPE * e)           # LeakyReLU
    e = jnp.where(adj > 0, e, -1e30)                 # mask non-edges (incl. cross-graph)
    m = jnp.max(e, axis=1, keepdims=True)
    num = jnp.exp(e - m) * adj
    den = jnp.sum(num, axis=1, keepdims=True)        # >= exp(0) thanks to self-loops
    return num * pl.reciprocal(den, approx=True)     # divide on the EUP, not the VPU


def gat_encoder_kernel(x_ref, adj_ref, p1_ref, p2_ref, out_ref, x1_scr, *, gb, n):
    rows = gb * n
    x = x_ref[...]                                   # [rows, IN_CH]
    adj = adj_ref[...]                               # [rows, rows], block-diagonal

    # ---- conv1: fused transform.  p1 rows 0..15 = [W1 | fold(W1,a_dst)], so ONE matmul
    # yields every head's features AND every node's per-head "dst" score. ----
    big = jnp.dot(x, p1_ref[0:IN_CH, :], preferred_element_type=jnp.float32)   # [rows, 36]
    h_all = big[:, 0:C1]                             # [rows, 32]
    s_dst = big[:, C1:C1 + HEADS]                    # [rows, 4]
    # "src" scores laid out as [HEADS, rows] row-vectors (no in-kernel transpose needed).
    s_src = jax.lax.dot_general(
        p1_ref[IN_CH + 1:IN_CH + 1 + HEADS, 0:IN_CH], x,
        (((1,), (1,)), ((), ())), preferred_element_type=jnp.float32)          # [4, rows]

    for hd in range(HEADS):
        e = s_dst[:, hd:hd + 1] + s_src[hd:hd + 1, :]                          # [rows, rows]
        alpha = _masked_softmax_rows(e, adj)
        # This head's aggregation goes to a static lane offset of the scratch (no concat).
        x1_scr[:, hd * HIDDEN:(hd + 1) * HIDDEN] = jnp.dot(
            alpha, h_all[:, hd * HIDDEN:(hd + 1) * HIDDEN],
            preferred_element_type=jnp.float32)

    b1 = p1_ref[IN_CH:IN_CH + 1, 0:C1]               # [1, 32]
    x1 = jnp.maximum(x1_scr[...] + b1, 0.0)          # bias + ReLU, [rows, 32]

    # ---- conv2: single head, concat=False (mean over one head == identity) ----
    big2 = jnp.dot(x1, p2_ref[0:C1, 0:OUT_CH + 1],
                   preferred_element_type=jnp.float32)                         # [rows, 9]
    h2 = big2[:, 0:OUT_CH]
    sd2 = big2[:, OUT_CH:OUT_CH + 1]                 # [rows, 1]
    ss2 = jax.lax.dot_general(
        p2_ref[C1 + 1:C1 + 2, 0:C1], x1,
        (((1,), (1,)), ((), ())), preferred_element_type=jnp.float32)          # [1, rows]
    alpha2 = _masked_softmax_rows(sd2 + ss2, adj)
    b2 = p2_ref[C1:C1 + 1, 0:OUT_CH]                 # [1, 8]
    x2 = jnp.dot(alpha2, h2, preferred_element_type=jnp.float32) + b2          # [rows, 8]

    # ---- global_mean_pool: one [gb, rows] one-hot matmul (mean over each graph's n nodes) ----
    r = jax.lax.broadcasted_iota(jnp.int32, (gb, rows), 0)
    c = jax.lax.broadcasted_iota(jnp.int32, (gb, rows), 1)
    pool = jnp.logical_and(c >= r * n, c < r * n + n).astype(jnp.float32) * (1.0 / n)
    out_ref[...] = jnp.dot(pool, x2, preferred_element_type=jnp.float32)       # [gb, 8]


def pack_params(params):
    """Pack the 10 GATEncoder parameters into 2 arrays, pre-folding attention vectors."""
    w1, a_s1, a_d1, b1 = params["w1"], params["att_src1"], params["att_dst1"], params["b1"]
    w1h = w1.reshape(IN_CH, HEADS, HIDDEN)
    w_dst = jnp.einsum("fhc,hc->fh", w1h, a_d1)            # [16, 4]  dst-score columns
    w_src_t = jnp.einsum("fhc,hc->hf", w1h, a_s1)          # [4, 16]  src-score rows
    width1 = C1 + HEADS                                    # 36
    top1 = jnp.concatenate([w1, w_dst], axis=1)            # [16, 36]
    b1_row = jnp.pad(b1[None, :], ((0, 0), (0, width1 - C1)))
    src1 = jnp.pad(w_src_t, ((0, 0), (0, width1 - IN_CH)))
    p1 = jnp.concatenate([top1, b1_row, src1], axis=0).astype(jnp.float32)     # [21, 36]

    w2, a_s2, a_d2, b2 = params["w2"], params["att_src2"], params["att_dst2"], params["b2"]
    width2 = C1                                            # 32
    top2 = jnp.pad(jnp.concatenate([w2, w2 @ a_d2.T], axis=1),
                   ((0, 0), (0, width2 - (OUT_CH + 1))))                       # [32, 32]
    b2_row = jnp.pad(b2[None, :], ((0, 0), (0, width2 - OUT_CH)))              # [1, 32]
    src2 = (w2 @ a_s2.T).T                                                     # [1, 32]
    p2 = jnp.concatenate([top2, b2_row, src2], axis=0).astype(jnp.float32)     # [34, 32]
    return p1, p2


def gat_encoder(x, adj, params, *, graphs_per_block=16):
    """x: [B, N, IN_CH] node features; adj: [B, N, N] dense adjacency incl. self-loops."""
    B, n, f = x.shape
    gb = graphs_per_block
    assert B % gb == 0, "batch must be a multiple of graphs_per_block"
    nb = B // gb
    rows = gb * n

    p1, p2 = pack_params(params)
    x_flat = x.reshape(B * n, f)
    # Block-diagonal adjacency per block of gb graphs: [nb*rows, rows].
    adj_bd = jnp.einsum("bgij,gh->bgihj", adj.reshape(nb, gb, n, n),
                        jnp.eye(gb, dtype=adj.dtype)).reshape(nb * rows, rows)

    kernel = functools.partial(gat_encoder_kernel, gb=gb, n=n)
    return pl.pallas_call(
        kernel,
        out_shape=jax.ShapeDtypeStruct((B, OUT_CH), jnp.float32),
        grid=(nb,),
        in_specs=[
            pl.BlockSpec((rows, f), lambda g: (g, 0)),
            pl.BlockSpec((rows, rows), lambda g: (g, 0)),
            pl.BlockSpec(p1.shape, lambda g: (0, 0)),
            pl.BlockSpec(p2.shape, lambda g: (0, 0)),
        ],
        out_specs=pl.BlockSpec((gb, OUT_CH), lambda g: (g, 0)),
        scratch_shapes=[pltpu.VMEM((rows, C1), jnp.float32)],
        compiler_params=pltpu.CompilerParams(
            dimension_semantics=("parallel",)),  # graph blocks shard across TCs on v7x
    )(x_flat, adj_bd, p1, p2)


def build_adjacency(edge_index, n):
    src, dst = edge_index[0], edge_index[1]
    adj = jnp.zeros((n, n), jnp.float32)
    adj = adj.at[dst, src].set(1.0)            # message src -> dst, aggregated at dst
    idx = jnp.arange(n)
    adj = adj.at[idx, idx].set(1.0)            # add_self_loops=True
    return adj


# ---------------- pure-JAX reference (exact division, per graph) ----------------
def _gat_layer_ref(x, adj, w, a_src, a_dst, bias, heads, ch):
    h = x @ w
    outs = []
    for hd in range(heads):
        hh = h[:, hd * ch:(hd + 1) * ch]
        e = (hh @ a_dst[hd])[:, None] + (hh @ a_src[hd])[None, :]
        e = jnp.where(e > 0, e, NEG_SLOPE * e)
        e = jnp.where(adj > 0, e, -1e30)
        e = e - e.max(axis=1, keepdims=True)
        p = jnp.exp(e) * adj
        outs.append((p / p.sum(axis=1, keepdims=True)) @ hh)
    return jnp.concatenate(outs, axis=-1) + bias


def _forward_ref(x, adj, params):
    x1 = jax.nn.relu(_gat_layer_ref(x, adj, params["w1"], params["att_src1"],
                                    params["att_dst1"], params["b1"], HEADS, HIDDEN))
    x2 = _gat_layer_ref(x1, adj, params["w2"], params["att_src2"],
                        params["att_dst2"], params["b2"], 1, OUT_CH)
    return x2.mean(axis=0)


if __name__ == "__main__":
    key = jax.random.PRNGKey(0)
    keys = jax.random.split(key, 8)

    B = 64   # batch of graphs; graph 0 plays the role of nn.Embedding(5,16)(y)
    x = 0.5 * jax.random.normal(keys[0], (B, N_NODES, IN_CH), jnp.float32)

    edge_index = jnp.array([[0, 0, 0, 0, 1, 3],
                            [1, 2, 3, 4, 2, 4]], dtype=jnp.int32)
    adj1 = build_adjacency(edge_index, N_NODES)
    adj = jnp.tile(adj1[None], (B, 1, 1))

    params = {
        "w1": 0.1 * jax.random.normal(keys[1], (IN_CH, C1), jnp.float32),
        "att_src1": 0.1 * jax.random.normal(keys[2], (HEADS, HIDDEN), jnp.float32),
        "att_dst1": 0.1 * jax.random.normal(keys[3], (HEADS, HIDDEN), jnp.float32),
        "b1": jnp.zeros((C1,), jnp.float32),          # GATConv bias init = 0
        "w2": 0.1 * jax.random.normal(keys[4], (C1, OUT_CH), jnp.float32),
        "att_src2": 0.1 * jax.random.normal(keys[5], (1, OUT_CH), jnp.float32),
        "att_dst2": 0.1 * jax.random.normal(keys[6], (1, OUT_CH), jnp.float32),
        "b2": jnp.zeros((OUT_CH,), jnp.float32),
    }

    out = gat_encoder(x, adj, params)
    jax.block_until_ready(out)
    assert out.shape == (B, OUT_CH)

    ref = jax.vmap(lambda xg, ag: _forward_ref(xg, ag, params))(x, adj)
    err = float(jnp.max(jnp.abs(out - ref)))
    assert jnp.allclose(out, ref, rtol=2e-2, atol=2e-3), f"max |diff| = {err}"
    print("KERNEL_OK")
</pallas_src>

<mosaic_0001>
module attributes {stable_mosaic.version = 11 : i64} {
  func.func @gat_encoder_kernel(%arg0: i32, %arg1: memref<80x16xf32, #tpu.memory_space<vmem>>, %arg2: memref<80x80xf32, #tpu.memory_space<vmem>>, %arg3: memref<21x36xf32, #tpu.memory_space<vmem>>, %arg4: memref<34x32xf32, #tpu.memory_space<vmem>>, %arg5: memref<16x8xf32, #tpu.memory_space<vmem>>, %arg6: memref<80x32xf32, #tpu.memory_space<vmem>>) attributes {dimension_semantics = [#tpu.dimension_semantics<parallel>], iteration_bounds = array<i64: 4>, scalar_prefetch = 0 : i64, scratch_operands = 1 : i64, tpu.core_type = #tpu.core_type<tc>, window_params = [{transform_indices = @transform_0, window_bounds = array<i64: 80, 16>}, {transform_indices = @transform_1, window_bounds = array<i64: 80, 80>}, {pipeline_mode = #tpu.pipeline_mode<synchronous>, transform_indices = @transform_2, window_bounds = array<i64: 21, 36>}, {pipeline_mode = #tpu.pipeline_mode<synchronous>, transform_indices = @transform_3, window_bounds = array<i64: 34, 32>}, {transform_indices = @transform_4, window_bounds = array<i64: 16, 8>}]} {
    %c0 = arith.constant 0 : index
    %c0_0 = arith.constant 0 : index
    %0 = vector.load %arg1[%c0, %c0_0] : memref<80x16xf32, #tpu.memory_space<vmem>>, vector<80x16xf32>
    %c0_1 = arith.constant 0 : index
    %c0_2 = arith.constant 0 : index
    %1 = vector.load %arg2[%c0_1, %c0_2] : memref<80x80xf32, #tpu.memory_space<vmem>>, vector<80x80xf32>
    %c0_3 = arith.constant 0 : index
    %c0_4 = arith.constant 0 : index
    %2 = vector.load %arg3[%c0_3, %c0_4] : memref<21x36xf32, #tpu.memory_space<vmem>>, vector<16x36xf32>
    %cst = arith.constant dense<0.000000e+00> : vector<80x36xf32>
    %3 = tpu.matmul %0, %2, %cst {dimension_numbers = #tpu.dot_dimension_numbers<[1], [0], [0], [1], [0, 0, 1, 1], [], []>} : vector<80x16xf32>, vector<16x36xf32>, vector<80x36xf32> -> vector<80x36xf32>
    %4 = vector.extract_strided_slice %3 {offsets = [0, 0], sizes = [80, 32], strides = [1, 1]} : vector<80x36xf32> to vector<80x32xf32>
    %5 = vector.extract_strided_slice %3 {offsets = [0, 32], sizes = [80, 4], strides = [1, 1]} : vector<80x36xf32> to vector<80x4xf32>
    %c17 = arith.constant 17 : index
    %c0_5 = arith.constant 0 : index
    %6 = vector.load %arg3[%c17, %c0_5] : memref<21x36xf32, #tpu.memory_space<vmem>>, vector<4x16xf32>
    %cst_6 = arith.constant dense<0.000000e+00> : vector<4x80xf32>
    %7 = tpu.matmul %6, %0, %cst_6 {dimension_numbers = #tpu.dot_dimension_numbers<[1], [1], [0], [0], [0, 0, 1, 0], [], []>} : vector<4x16xf32>, vector<80x16xf32>, vector<4x80xf32> -> vector<4x80xf32>
    %8 = vector.extract_strided_slice %5 {offsets = [0, 0], sizes = [80, 1], strides = [1, 1]} : vector<80x4xf32> to vector<80x1xf32>
    %9 = vector.extract_strided_slice %7 {offsets = [0, 0], sizes = [1, 80], strides = [1, 1]} : vector<4x80xf32> to vector<1x80xf32>
    %10 = vector.broadcast %8 : vector<80x1xf32> to vector<80x80xf32>
    %11 = vector.broadcast %9 : vector<1x80xf32> to vector<80x80xf32>
    %12 = arith.addf %10, %11 : vector<80x80xf32>
    %cst_7 = arith.constant 0.000000e+00 : f32
    %13 = vector.broadcast %cst_7 : f32 to vector<80x80xf32>
    %14 = arith.cmpf ogt, %12, %13 : vector<80x80xf32>
    %cst_8 = arith.constant 2.000000e-01 : f32
    %15 = vector.broadcast %cst_8 : f32 to vector<80x80xf32>
    %16 = arith.mulf %15, %12 : vector<80x80xf32>
    %17 = arith.select %14, %12, %16 : vector<80x80xi1>, vector<80x80xf32>
    %cst_9 = arith.constant 0.000000e+00 : f32
    %18 = vector.broadcast %cst_9 : f32 to vector<80x80xf32>
    %19 = arith.cmpf ogt, %1, %18 : vector<80x80xf32>
    %cst_10 = arith.constant -1.000000e+30 : f32
    %20 = vector.broadcast %cst_10 : f32 to vector<80x80xf32>
    %21 = arith.select %19, %17, %20 : vector<80x80xi1>, vector<80x80xf32>
    %cst_11 = arith.constant dense<0xFF800000> : vector<80xf32>
    %22 = vector.multi_reduction <maximumf>, %21, %cst_11 [1] : vector<80x80xf32> to vector<80xf32>
    %23 = vector.shape_cast %22 : vector<80xf32> to vector<80x1xf32>
    %24 = vector.broadcast %23 : vector<80x1xf32> to vector<80x80xf32>
    %25 = arith.subf %21, %24 : vector<80x80xf32>
    %26 = math.exp %25 : vector<80x80xf32>
    %27 = arith.mulf %26, %1 : vector<80x80xf32>
    %cst_12 = arith.constant dense<0.000000e+00> : vector<80xf32>
    %28 = vector.multi_reduction <add>, %27, %cst_12 [1] : vector<80x80xf32> to vector<80xf32>
    %29 = vector.shape_cast %28 : vector<80xf32> to vector<80x1xf32>
    %30 = tpu.reciprocal %29 {approx = true} : vector<80x1xf32> -> vector<80x1xf32>
    %31 = vector.broadcast %30 : vector<80x1xf32> to vector<80x80xf32>
    %32 = arith.mulf %27, %31 : vector<80x80xf32>
    %33 = vector.extract_strided_slice %4 {offsets = [0, 0], sizes = [80, 8], strides = [1, 1]} : vector<80x32xf32> to vector<80x8xf32>
    %cst_13 = arith.constant dense<0.000000e+00> : vector<80x8xf32>
    %34 = tpu.matmul %32, %33, %cst_13 {dimension_numbers = #tpu.dot_dimension_numbers<[1], [0], [0], [1], [0, 0, 1, 1], [], []>} : vector<80x80xf32>, vector<80x8xf32>, vector<80x8xf32> -> vector<80x8xf32>
    %c0_14 = arith.constant 0 : index
    %c0_15 = arith.constant 0 : index
    %35 = vector.load %arg6[%c0_14, %c0_15] : memref<80x32xf32, #tpu.memory_space<vmem>>, vector<80x8xf32>
    tpu.vector_store %arg6[%c0_14, %c0_15], %34 {strides = array<i32>} : memref<80x32xf32, #tpu.memory_space<vmem>>, vector<80x8xf32>,
    %36 = vector.extract_strided_slice %5 {offsets = [0, 1], sizes = [80, 1], strides = [1, 1]} : vector<80x4xf32> to vector<80x1xf32>
    %37 = vector.extract_strided_slice %7 {offsets = [1, 0], sizes = [1, 80], strides = [1, 1]} : vector<4x80xf32> to vector<1x80xf32>
    %38 = vector.broadcast %36 : vector<80x1xf32> to vector<80x80xf32>
    %39 = vector.broadcast %37 : vector<1x80xf32> to vector<80x80xf32>
    %40 = arith.addf %38, %39 : vector<80x80xf32>
    %cst_16 = arith.constant 0.000000e+00 : f32
    %41 = vector.broadcast %cst_16 : f32 to vector<80x80xf32>
    %42 = arith.cmpf ogt, %40, %41 : vector<80x80xf32>
    %cst_17 = arith.constant 2.000000e-01 : f32
    %43 = vector.broadcast %cst_17 : f32 to vector<80x80xf32>
    %44 = arith.mulf %43, %40 : vector<80x80xf32>
    %45 = arith.select %42, %40, %44 : vector<80x80xi1>, vector<80x80xf32>
    %cst_18 = arith.constant 0.000000e+00 : f32
    %46 = vector.broadcast %cst_18 : f32 to vector<80x80xf32>
    %47 = arith.cmpf ogt, %1, %46 : vector<80x80xf32>
    %cst_19 = arith.constant -1.000000e+30 : f32
    %48 = vector.broadcast %cst_19 : f32 to vector<80x80xf32>
    %49 = arith.select %47, %45, %48 : vector<80x80xi1>, vector<80x80xf32>
    %cst_20 = arith.constant dense<0xFF800000> : vector<80xf32>
    %50 = vector.multi_reduction <maximumf>, %49, %cst_20 [1] : vector<80x80xf32> to vector<80xf32>
    %51 = vector.shape_cast %50 : vector<80xf32> to vector<80x1xf32>
    %52 = vector.broadcast %51 : vector<80x1xf32> to vector<80x80xf32>
    %53 = arith.subf %49, %52 : vector<80x80xf32>
    %54 = math.exp %53 : vector<80x80xf32>
    %55 = arith.mulf %54, %1 : vector<80x80xf32>
    %cst_21 = arith.constant dense<0.000000e+00> : vector<80xf32>
    %56 = vector.multi_reduction <add>, %55, %cst_21 [1] : vector<80x80xf32> to vector<80xf32>
    %57 = vector.shape_cast %56 : vector<80xf32> to vector<80x1xf32>
    %58 = tpu.reciprocal %57 {approx = true} : vector<80x1xf32> -> vector<80x1xf32>
    %59 = vector.broadcast %58 : vector<80x1xf32> to vector<80x80xf32>
    %60 = arith.mulf %55, %59 : vector<80x80xf32>
    %61 = vector.extract_strided_slice %4 {offsets = [0, 8], sizes = [80, 8], strides = [1, 1]} : vector<80x32xf32> to vector<80x8xf32>
    %cst_22 = arith.constant dense<0.000000e+00> : vector<80x8xf32>
    %62 = tpu.matmul %60, %61, %cst_22 {dimension_numbers = #tpu.dot_dimension_numbers<[1], [0], [0], [1], [0, 0, 1, 1], [], []>} : vector<80x80xf32>, vector<80x8xf32>, vector<80x8xf32> -> vector<80x8xf32>
    %c0_23 = arith.constant 0 : index
    %c8 = arith.constant 8 : index
    %63 = vector.load %arg6[%c0_23, %c8] : memref<80x32xf32, #tpu.memory_space<vmem>>, vector<80x8xf32>
    tpu.vector_store %arg6[%c0_23, %c8], %62 {strides = array<i32>} : memref<80x32xf32, #tpu.memory_space<vmem>>, vector<80x8xf32>,
    %64 = vector.extract_strided_slice %5 {offsets = [0, 2], sizes = [80, 1], strides = [1, 1]} : vector<80x4xf32> to vector<80x1xf32>
    %65 = vector.extract_strided_slice %7 {offsets = [2, 0], sizes = [1, 80], strides = [1, 1]} : vector<4x80xf32> to vector<1x80xf32>
    %66 = vector.broadcast %64 : vector<80x1xf32> to vector<80x80xf32>
    %67 = vector.broadcast %65 : vector<1x80xf32> to vector<80x80xf32>
    %68 = arith.addf %66, %67 : vector<80x80xf32>
    %cst_24 = arith.constant 0.000000e+00 : f32
    %69 = vector.broadcast %cst_24 : f32 to vector<80x80xf32>
    %70 = arith.cmpf ogt, %68, %69 : vector<80x80xf32>
    %cst_25 = arith.constant 2.000000e-01 : f32
    %71 = vector.broadcast %cst_25 : f32 to vector<80x80xf32>
    %72 = arith.mulf %71, %68 : vector<80x80xf32>
    %73 = arith.select %70, %68, %72 : vector<80x80xi1>, vector<80x80xf32>
    %cst_26 = arith.constant 0.000000e+00 : f32
    %74 = vector.broadcast %cst_26 : f32 to vector<80x80xf32>
    %75 = arith.cmpf ogt, %1, %74 : vector<80x80xf32>
    %cst_27 = arith.constant -1.000000e+30 : f32
    %76 = vector.broadcast %cst_27 : f32 to vector<80x80xf32>
    %77 = arith.select %75, %73, %76 : vector<80x80xi1>, vector<80x80xf32>
    %cst_28 = arith.constant dense<0xFF800000> : vector<80xf32>
    %78 = vector.multi_reduction <maximumf>, %77, %cst_28 [1] : vector<80x80xf32> to vector<80xf32>
    %79 = vector.shape_cast %78 : vector<80xf32> to vector<80x1xf32>
    %80 = vector.broadcast %79 : vector<80x1xf32> to vector<80x80xf32>
    %81 = arith.subf %77, %80 : vector<80x80xf32>
    %82 = math.exp %81 : vector<80x80xf32>
    %83 = arith.mulf %82, %1 : vector<80x80xf32>
    %cst_29 = arith.constant dense<0.000000e+00> : vector<80xf32>
    %84 = vector.multi_reduction <add>, %83, %cst_29 [1] : vector<80x80xf32> to vector<80xf32>
    %85 = vector.shape_cast %84 : vector<80xf32> to vector<80x1xf32>
    %86 = tpu.reciprocal %85 {approx = true} : vector<80x1xf32> -> vector<80x1xf32>
    %87 = vector.broadcast %86 : vector<80x1xf32> to vector<80x80xf32>
    %88 = arith.mulf %83, %87 : vector<80x80xf32>
    %89 = vector.extract_strided_slice %4 {offsets = [0, 16], sizes = [80, 8], strides = [1, 1]} : vector<80x32xf32> to vector<80x8xf32>
    %cst_30 = arith.constant dense<0.000000e+00> : vector<80x8xf32>
    %90 = tpu.matmul %88, %89, %cst_30 {dimension_numbers = #tpu.dot_dimension_numbers<[1], [0], [0], [1], [0, 0, 1, 1], [], []>} : vector<80x80xf32>, vector<80x8xf32>, vector<80x8xf32> -> vector<80x8xf32>
    %c0_31 = arith.constant 0 : index
    %c16 = arith.constant 16 : index
    %91 = vector.load %arg6[%c0_31, %c16] : memref<80x32xf32, #tpu.memory_space<vmem>>, vector<80x8xf32>
    tpu.vector_store %arg6[%c0_31, %c16], %90 {strides = array<i32>} : memref<80x32xf32, #tpu.memory_space<vmem>>, vector<80x8xf32>,
    %92 = vector.extract_strided_slice %5 {offsets = [0, 3], sizes = [80, 1], strides = [1, 1]} : vector<80x4xf32> to vector<80x1xf32>
    %93 = vector.extract_strided_slice %7 {offsets = [3, 0], sizes = [1, 80], strides = [1, 1]} : vector<4x80xf32> to vector<1x80xf32>
    %94 = vector.broadcast %92 : vector<80x1xf32> to vector<80x80xf32>
    %95 = vector.broadcast %93 : vector<1x80xf32> to vector<80x80xf32>
    %96 = arith.addf %94, %95 : vector<80x80xf32>
    %cst_32 = arith.constant 0.000000e+00 : f32
    %97 = vector.broadcast %cst_32 : f32 to vector<80x80xf32>
    %98 = arith.cmpf ogt, %96, %97 : vector<80x80xf32>
    %cst_33 = arith.constant 2.000000e-01 : f32
    %99 = vector.broadcast %cst_33 : f32 to vector<80x80xf32>
    %100 = arith.mulf %99, %96 : vector<80x80xf32>
    %101 = arith.select %98, %96, %100 : vector<80x80xi1>, vector<80x80xf32>
    %cst_34 = arith.constant 0.000000e+00 : f32
    %102 = vector.broadcast %cst_34 : f32 to vector<80x80xf32>
    %103 = arith.cmpf ogt, %1, %102 : vector<80x80xf32>
    %cst_35 = arith.constant -1.000000e+30 : f32
    %104 = vector.broadcast %cst_35 : f32 to vector<80x80xf32>
    %105 = arith.select %103, %101, %104 : vector<80x80xi1>, vector<80x80xf32>
    %cst_36 = arith.constant dense<0xFF800000> : vector<80xf32>
    %106 = vector.multi_reduction <maximumf>, %105, %cst_36 [1] : vector<80x80xf32> to vector<80xf32>
    %107 = vector.shape_cast %106 : vector<80xf32> to vector<80x1xf32>
    %108 = vector.broadcast %107 : vector<80x1xf32> to vector<80x80xf32>
    %109 = arith.subf %105, %108 : vector<80x80xf32>
    %110 = math.exp %109 : vector<80x80xf32>
    %111 = arith.mulf %110, %1 : vector<80x80xf32>
    %cst_37 = arith.constant dense<0.000000e+00> : vector<80xf32>
    %112 = vector.multi_reduction <add>, %111, %cst_37 [1] : vector<80x80xf32> to vector<80xf32>
    %113 = vector.shape_cast %112 : vector<80xf32> to vector<80x1xf32>
    %114 = tpu.reciprocal %113 {approx = true} : vector<80x1xf32> -> vector<80x1xf32>
    %115 = vector.broadcast %114 : vector<80x1xf32> to vector<80x80xf32>
    %116 = arith.mulf %111, %115 : vector<80x80xf32>
    %117 = vector.extract_strided_slice %4 {offsets = [0, 24], sizes = [80, 8], strides = [1, 1]} : vector<80x32xf32> to vector<80x8xf32>
    %cst_38 = arith.constant dense<0.000000e+00> : vector<80x8xf32>
    %118 = tpu.matmul %116, %117, %cst_38 {dimension_numbers = #tpu.dot_dimension_numbers<[1], [0], [0], [1], [0, 0, 1, 1], [], []>} : vector<80x80xf32>, vector<80x8xf32>, vector<80x8xf32> -> vector<80x8xf32>
    %c0_39 = arith.constant 0 : index
    %c24 = arith.constant 24 : index
    %119 = vector.load %arg6[%c0_39, %c24] : memref<80x32xf32, #tpu.memory_space<vmem>>, vector<80x8xf32>
    tpu.vector_store %arg6[%c0_39, %c24], %118 {strides = array<i32>} : memref<80x32xf32, #tpu.memory_space<vmem>>, vector<80x8xf32>,
    %c16_40 = arith.constant 16 : index
    %c0_41 = arith.constant 0 : index
    %120 = vector.load %arg3[%c16_40, %c0_41] : memref<21x36xf32, #tpu.memory_space<vmem>>, vector<1x32xf32>
    %c0_42 = arith.constant 0 : index
    %c0_43 = arith.constant 0 : index
    %121 = vector.load %arg6[%c0_42, %c0_43] : memref<80x32xf32, #tpu.memory_space<vmem>>, vector<80x32xf32>
    %122 = vector.broadcast %120 : vector<1x32xf32> to vector<80x32xf32>
    %123 = arith.addf %121, %122 : vector<80x32xf32>
    %cst_44 = arith.constant 0.000000e+00 : f32
    %124 = vector.broadcast %cst_44 : f32 to vector<80x32xf32>
    %125 = arith.maximumf %123, %124 : vector<80x32xf32>
    %c0_45 = arith.constant 0 : index
    %c0_46 = arith.constant 0 : index
    %126 = vector.load %arg4[%c0_45, %c0_46] : memref<34x32xf32, #tpu.memory_space<vmem>>, vector<32x9xf32>
    %cst_47 = arith.constant dense<0.000000e+00> : vector<80x9xf32>
    %127 = tpu.matmul %125, %126, %cst_47 {dimension_numbers = #tpu.dot_dimension_numbers<[1], [0], [0], [1], [0, 0, 1, 1], [], []>} : vector<80x32xf32>, vector<32x9xf32>, vector<80x9xf32> -> vector<80x9xf32>
    %128 = vector.extract_strided_slice %127 {offsets = [0, 0], sizes = [80, 8], strides = [1, 1]} : vector<80x9xf32> to vector<80x8xf32>
    %129 = vector.extract_strided_slice %127 {offsets = [0, 8], sizes = [80, 1], strides = [1, 1]} : vector<80x9xf32> to vector<80x1xf32>
    %c33 = arith.constant 33 : index
    %c0_48 = arith.constant 0 : index
    %130 = vector.load %arg4[%c33, %c0_48] : memref<34x32xf32, #tpu.memory_space<vmem>>, vector<1x32xf32>
    %cst_49 = arith.constant dense<0.000000e+00> : vector<1x80xf32>
    %131 = tpu.matmul %130, %125, %cst_49 {dimension_numbers = #tpu.dot_dimension_numbers<[1], [1], [0], [0], [0, 0, 1, 0], [], []>} : vector<1x32xf32>, vector<80x32xf32>, vector<1x80xf32> -> vector<1x80xf32>
    %132 = vector.broadcast %129 : vector<80x1xf32> to vector<80x80xf32>
    %133 = vector.broadcast %131 : vector<1x80xf32> to vector<80x80xf32>
    %134 = arith.addf %132, %133 : vector<80x80xf32>
    %cst_50 = arith.constant 0.000000e+00 : f32
    %135 = vector.broadcast %cst_50 : f32 to vector<80x80xf32>
    %136 = arith.cmpf ogt, %134, %135 : vector<80x80xf32>
    %cst_51 = arith.constant 2.000000e-01 : f32
    %137 = vector.broadcast %cst_51 : f32 to vector<80x80xf32>
    %138 = arith.mulf %137, %134 : vector<80x80xf32>
    %139 = arith.select %136, %134, %138 : vector<80x80xi1>, vector<80x80xf32>
    %cst_52 = arith.constant 0.000000e+00 : f32
    %140 = vector.broadcast %cst_52 : f32 to vector<80x80xf32>
    %141 = arith.cmpf ogt, %1, %140 : vector<80x80xf32>
    %cst_53 = arith.constant -1.000000e+30 : f32
    %142 = vector.broadcast %cst_53 : f32 to vector<80x80xf32>
    %143 = arith.select %141, %139, %142 : vector<80x80xi1>, vector<80x80xf32>
    %cst_54 = arith.constant dense<0xFF800000> : vector<80xf32>
    %144 = vector.multi_reduction <maximumf>, %143, %cst_54 [1] : vector<80x80xf32> to vector<80xf32>
    %145 = vector.shape_cast %144 : vector<80xf32> to vector<80x1xf32>
    %146 = vector.broadcast %145 : vector<80x1xf32> to vector<80x80xf32>
    %147 = arith.subf %143, %146 : vector<80x80xf32>
    %148 = math.exp %147 : vector<80x80xf32>
    %149 = arith.mulf %148, %1 : vector<80x80xf32>
    %cst_55 = arith.constant dense<0.000000e+00> : vector<80xf32>
    %150 = vector.multi_reduction <add>, %149, %cst_55 [1] : vector<80x80xf32> to vector<80xf32>
    %151 = vector.shape_cast %150 : vector<80xf32> to vector<80x1xf32>
    %152 = tpu.reciprocal %151 {approx = true} : vector<80x1xf32> -> vector<80x1xf32>
    %153 = vector.broadcast %152 : vector<80x1xf32> to vector<80x80xf32>
    %154 = arith.mulf %149, %153 : vector<80x80xf32>
    %c32 = arith.constant 32 : index
    %c0_56 = arith.constant 0 : index
    %155 = vector.load %arg4[%c32, %c0_56] : memref<34x32xf32, #tpu.memory_space<vmem>>, vector<1x8xf32>
    %cst_57 = arith.constant dense<0.000000e+00> : vector<80x8xf32>
    %156 = tpu.matmul %154, %128, %cst_57 {dimension_numbers = #tpu.dot_dimension_numbers<[1], [0], [0], [1], [0, 0, 1, 1], [], []>} : vector<80x80xf32>, vector<80x8xf32>, vector<80x8xf32> -> vector<80x8xf32>
    %157 = vector.broadcast %155 : vector<1x8xf32> to vector<80x8xf32>
    %158 = arith.addf %156, %157 : vector<80x8xf32>
    %159 = tpu.iota {dimensions = array<i32: 0>} : vector<16x80xi32>
    %160 = tpu.iota {dimensions = array<i32: 1>} : vector<16x80xi32>
    %c5_i32 = arith.constant 5 : i32
    %161 = vector.broadcast %c5_i32 : i32 to vector<16x80xi32>
    %162 = arith.muli %159, %161 : vector<16x80xi32>
    %163 = arith.cmpi sge, %160, %162 : vector<16x80xi32>
    %c5_i32_58 = arith.constant 5 : i32
    %164 = vector.broadcast %c5_i32_58 : i32 to vector<16x80xi32>
    %165 = arith.muli %159, %164 : vector<16x80xi32>
    %c5_i32_59 = arith.constant 5 : i32
    %166 = vector.broadcast %c5_i32_59 : i32 to vector<16x80xi32>
    %167 = arith.addi %165, %166 : vector<16x80xi32>
    %168 = arith.cmpi slt, %160, %167 : vector<16x80xi32>
    %169 = arith.andi %163, %168 : vector<16x80xi1>
    %170 = arith.extui %169 : vector<16x80xi1> to vector<16x80xi32>
    %171 = arith.sitofp %170 : vector<16x80xi32> to vector<16x80xf32>
    %cst_60 = arith.constant 2.000000e-01 : f32
    %172 = vector.broadcast %cst_60 : f32 to vector<16x80xf32>
    %173 = arith.mulf %171, %172 : vector<16x80xf32>
    %cst_61 = arith.constant dense<0.000000e+00> : vector<16x8xf32>
    %174 = tpu.matmul %173, %158, %cst_61 {dimension_numbers = #tpu.dot_dimension_numbers<[1], [0], [0], [1], [0, 0, 1, 1], [], []>} : vector<16x80xf32>, vector<80x8xf32>, vector<16x8xf32> -> vector<16x8xf32>
    %c0_62 = arith.constant 0 : index
    %c0_63 = arith.constant 0 : index
    %175 = vector.load %arg5[%c0_62, %c0_63] : memref<16x8xf32, #tpu.memory_space<vmem>>, vector<16x8xf32>
    tpu.vector_store %arg5[%c0_62, %c0_63], %174 {strides = array<i32>} : memref<16x8xf32, #tpu.memory_space<vmem>>, vector<16x8xf32>,
    return
  }
  func.func @transform_0(%arg0: i32) -> (i32, i32) {
    %c0_i32 = arith.constant 0 : i32
    %c0_i32_0 = arith.constant 0 : i32
    return %arg0, %c0_i32 : i32, i32
  }
  func.func @transform_1(%arg0: i32) -> (i32, i32) {
    %c0_i32 = arith.constant 0 : i32
    %c0_i32_0 = arith.constant 0 : i32
    return %arg0, %c0_i32 : i32, i32
  }
  func.func @transform_2(%arg0: i32) -> (i32, i32) {
    %c0_i32 = arith.constant 0 : i32
    %c0_i32_0 = arith.constant 0 : i32
    %c0_i32_1 = arith.constant 0 : i32
    return %c0_i32, %c0_i32_0 : i32, i32
  }
  func.func @transform_3(%arg0: i32) -> (i32, i32) {
    %c0_i32 = arith.constant 0 : i32
    %c0_i32_0 = arith.constant 0 : i32
    %c0_i32_1 = arith.constant 0 : i32
    return %c0_i32, %c0_i32_0 : i32, i32
  }
  func.func @transform_4(%arg0: i32) -> (i32, i32) {
    %c0_i32 = arith.constant 0 : i32
    %c0_i32_0 = arith.constant 0 : i32
    return %arg0, %c0_i32 : i32, i32
  }
}

</mosaic_0001>

<llo_original>
// kernel: tpu_custom_call.1
$region0: #{tpu_custom_call.1}
  #allocation0 [shape = 'u32[]', space=smem, size = 0x4, offset = 0x4, fixed_abs, tag = 'smem constant byte address 0x4 - core index']
  #allocation1 [shape = 'u32[144,128]{1,0:T(1,128)}', space=vmem, size = 0x12000, scoped, tag = 'internal scratch']
  #allocation2 [shape = 'f32[80,32]{1,0:T(8,128)}', space=vmem, size = 0xa000, scoped, tag = 'scratch operand']
  %s0 = inlined_call_operand.vmem [shape: f32[320,16], index: 0, kind: input, shape index: {}]
  %s1 = inlined_call_operand.vmem [shape: f32[320,80], index: 1, kind: input, shape index: {}]
  %s2 = inlined_call_operand.vmem [shape: f32[21,36], index: 2, kind: input, shape index: {}]
  %s3 = inlined_call_operand.vmem [shape: f32[34,32], index: 3, kind: input, shape index: {}]
  %s4 = inlined_call_operand.vmem [shape: f32[64,8], index: 4, kind: output, shape index: {}]
  %s5 = sld [smem:[#allocation0]]
  $region49: #{tpu_custom_call.1} parent=0
    _
  %s7 = ssub.s32 1, %s5
  %s8 = scalar_select 0, %s7, %s5
  loop: start=0, step=1, limit=6
  $region2: #{tpu_custom_call.1} parent=0 // loop_pre_header
    _
  $region3: #{tpu_custom_call.1} parent=0 // loop_header
    %s10 = sphi 0, %s14
    %p11 = scmp.ge.s32.totalorder %s10, 6
    %s20 = sphi 0, %s22
    %s23 = sphi 0, %s20
    %s24 = sphi 0, %s23
    %s40 = sphi 0, %s24
    %s46 = sphi 0, %s48
    %s49 = sphi 0, %s46
    %s50 = sphi 0, %s49
    %s66 = sphi 0, %s50
    %s70 = sphi 0, %s70
    %s72 = sphi 0, %s70
    %s73 = sphi 0, %s72
    %s87 = sphi 0, %s73
    %s91 = sphi 0, %s91
    %s93 = sphi 0, %s91
    %s94 = sphi 0, %s93
    %s108 = sphi 0, %s94
    %s114 = sphi 0, %s116
    %s117 = sphi 0, %s114
    %s118 = sphi 0, %s117
    %s134 = sphi 0, %s118
  $region4: #{tpu_custom_call.1} parent=0 // loop_header_branch
    %13 = sbr.rel (%p11) target = $region8
  $region5: #{tpu_custom_call.1} parent=0 // loop_body
    %s15 = ssub.s32 %s10, 1
    %s16 = ssub.s32 %s10, 2
    %s17 = sadd.s32 %s10, 1
    %s18 = ssub.s32 %s10, %s17
    %p19 = scmp.eq.s32.totalorder %s18, 0
    %s21 = sadd.s32 %s20, 1
    %s22 = scalar_select %p19, %s20, %s21
    %p25 = pneg %p19
    %p26 = scmp.eq.s32.totalorder %s10, 3
    %p27 = por %p25, %p26
    %p28 = scmp.ne.s32.totalorder %s20, %s23
    %p29 = scmp.eq.s32.totalorder %s10, 0
    %p30 = por %p28, %p29
    %p31 = scmp.ne.s32.totalorder %s20, %s23
    %p32 = scmp.eq.s32.totalorder %s15, 3
    %p33 = por %p31, %p32
    %p34 = scmp.ne.s32.totalorder %s23, %s24
    %p35 = scmp.eq.s32.totalorder %s15, 0
    %p36 = por %p34, %p35
    %p37 = scmp.ne.s32.totalorder %s23, %s24
    %p38 = scmp.eq.s32.totalorder %s16, 3
    %p39 = por %p37, %p38
    %p41 = scmp.ne.s32.totalorder %s24, %s40
    %p42 = scmp.eq.s32.totalorder %s16, 0
    %p43 = por %p41, %p42
    %s44 = ssub.s32 %s10, %s17
    %p45 = scmp.eq.s32.totalorder %s44, 0
    %s47 = sadd.s32 %s46, 1
    %s48 = scalar_select %p45, %s46, %s47
    %p51 = pneg %p45
    %p52 = scmp.eq.s32.totalorder %s10, 3
    %p53 = por %p51, %p52
    %p54 = scmp.ne.s32.totalorder %s46, %s49
    %p55 = scmp.eq.s32.totalorder %s10, 0
    %p56 = por %p54, %p55
    %p57 = scmp.ne.s32.totalorder %s46, %s49
    %p58 = scmp.eq.s32.totalorder %s15, 3
    %p59 = por %p57, %p58
    %p60 = scmp.ne.s32.totalorder %s49, %s50
    %p61 = scmp.eq.s32.totalorder %s15, 0
    %p62 = por %p60, %p61
    %p63 = scmp.ne.s32.totalorder %s49, %s50
    %p64 = scmp.eq.s32.totalorder %s16, 3
    %p65 = por %p63, %p64
    %p67 = scmp.ne.s32.totalorder %s50, %s66
    %p68 = scmp.eq.s32.totalorder %s16, 0
    %p69 = por %p67, %p68
    %s71 = sadd.s32 %s70, 1
    %p74 = scmp.eq.s32.totalorder %s10, 3
    %p75 = scmp.ne.s32.totalorder %s70, %s72
    %p76 = scmp.eq.s32.totalorder %s10, 0
    %p77 = por %p75, %p76
    %p78 = scmp.ne.s32.totalorder %s70, %s72
    %p79 = scmp.eq.s32.totalorder %s15, 3
    %p80 = por %p78, %p79
    %p81 = scmp.ne.s32.totalorder %s72, %s73
    %p82 = scmp.eq.s32.totalorder %s15, 0
    %p83 = por %p81, %p82
    %p84 = scmp.ne.s32.totalorder %s72, %s73
    %p85 = scmp.eq.s32.totalorder %s16, 3
    %p86 = por %p84, %p85
    %p88 = scmp.ne.s32.totalorder %s73, %s87
    %p89 = scmp.eq.s32.totalorder %s16, 0
    %p90 = por %p88, %p89
    %s92 = sadd.s32 %s91, 1
    %p95 = scmp.eq.s32.totalorder %s10, 3
    %p96 = scmp.ne.s32.totalorder %s91, %s93
    %p97 = scmp.eq.s32.totalorder %s10, 0
    %p98 = por %p96, %p97
    %p99 = scmp.ne.s32.totalorder %s91, %s93
    %p100 = scmp.eq.s32.totalorder %s15, 3
    %p101 = por %p99, %p100
    %p102 = scmp.ne.s32.totalorder %s93, %s94
    %p103 = scmp.eq.s32.totalorder %s15, 0
    %p104 = por %p102, %p103
    %p105 = scmp.ne.s32.totalorder %s93, %s94
    %p106 = scmp.eq.s32.totalorder %s16, 3
    %p107 = por %p105, %p106
    %p109 = scmp.ne.s32.totalorder %s94, %s108
    %p110 = scmp.eq.s32.totalorder %s16, 0
    %p111 = por %p109, %p110
    %s112 = ssub.s32 %s10, %s17
    %p113 = scmp.eq.s32.totalorder %s112, 0
    %s115 = sadd.s32 %s114, 1
    %s116 = scalar_select %p113, %s114, %s115
    %p119 = pneg %p113
    %p120 = scmp.eq.s32.totalorder %s10, 3
    %p121 = por %p119, %p120
    %p122 = scmp.ne.s32.totalorder %s114, %s117
    %p123 = scmp.eq.s32.totalorder %s10, 0
    %p124 = por %p122, %p123
    %p125 = scmp.ne.s32.totalorder %s114, %s117
    %p126 = scmp.eq.s32.totalorder %s15, 3
    %p127 = por %p125, %p126
    %p128 = scmp.ne.s32.totalorder %s117, %s118
    %p129 = scmp.eq.s32.totalorder %s15, 0
    %p130 = por %p128, %p129
    %p131 = scmp.ne.s32.totalorder %s117, %s118
    %p132 = scmp.eq.s32.totalorder %s16, 3
    %p133 = por %p131, %p132
    %p135 = scmp.ne.s32.totalorder %s118, %s134
    %p136 = scmp.eq.s32.totalorder %s16, 0
    %p137 = por %p135, %p136
    %p138 = scmp.le.s32.totalorder 1, %s10
    %p139 = scmp.lt.s32.totalorder %s10, 5
    %p140 = pnand %p138, %p139
    %p141 = pneg %p140
    // Predicated region
    $region9: #{tpu_custom_call.1} parent=5 // pred_check
      _
    $region10: #{tpu_custom_call.1} parent=5 // pred_check_branch
      %143 = sbr.rel (%p140) target = $region12
    $region11: #{tpu_custom_call.1} parent=5 // pred_region
      %s144 = ssub.s32 %s10, 1
      // Predicated region
      $region13: #{tpu_custom_call.1} parent=11 // pred_check
        %p145 = pneg %p83
      $region14: #{tpu_custom_call.1} parent=11 // pred_check_branch
        %147 = sbr.rel (%p145) target = $region16
      $region15: #{tpu_custom_call.1} parent=11 // pred_region
        _
      $region16: #{tpu_custom_call.1} parent=11 // pred_fallthru
        _
      // Predicated region
      $region17: #{tpu_custom_call.1} parent=11 // pred_check
        %p148 = pneg %p104
      $region18: #{tpu_custom_call.1} parent=11 // pred_check_branch
        %150 = sbr.rel (%p148) target = $region20
      $region19: #{tpu_custom_call.1} parent=11 // pred_region
        _
      $region20: #{tpu_custom_call.1} parent=11 // pred_fallthru
        _
    $region12: #{tpu_custom_call.1} parent=5 // pred_fallthru
      _
    %p151 = scmp.lt.s32.totalorder %s10, 4
    // Predicated region
    $region21: #{tpu_custom_call.1} parent=5 // pred_check
      %p152 = pneg %p151
    $region22: #{tpu_custom_call.1} parent=5 // pred_check_branch
      %154 = sbr.rel (%p152) target = $region24
    $region23: #{tpu_custom_call.1} parent=5 // pred_region
      // Predicated region
      $region25: #{tpu_custom_call.1} parent=23 // pred_check
        %p155 = pneg %p30
      $region26: #{tpu_custom_call.1} parent=23 // pred_check_branch
        %157 = sbr.rel (%p155) target = $region28
      $region27: #{tpu_custom_call.1} parent=23 // pred_region
        %s158 = smul.u32 10, %s10
        %p159 = scmp.lt.s32.totalorder %s158, 39
        %s160 = scalar_select %p159, %s158, 39
        %s161 = smul.addr %s160, 8
        %s162 = scalar_lea.vmem %s0, %s161
        %s163 = smul.u32 10, %s10
      $region28: #{tpu_custom_call.1} parent=23 // pred_fallthru
        _
      // Predicated region
      $region29: #{tpu_custom_call.1} parent=23 // pred_check
        %p164 = pneg %p56
      $region30: #{tpu_custom_call.1} parent=23 // pred_check_branch
        %166 = sbr.rel (%p164) target = $region32
      $region31: #{tpu_custom_call.1} parent=23 // pred_region
        %s167 = smul.u32 10, %s10
        %p168 = scmp.lt.s32.totalorder %s167, 39
        %s169 = scalar_select %p168, %s167, 39
        %s170 = smul.addr %s169, 8
        %s171 = scalar_lea.vmem %s1, %s170
        %s172 = smul.u32 10, %s10
      $region32: #{tpu_custom_call.1} parent=23 // pred_fallthru
        _
    $region24: #{tpu_custom_call.1} parent=5 // pred_fallthru
      _
    %p173 = scmp.le.s32.totalorder 1, %s10
    %p174 = scmp.lt.s32.totalorder %s10, 5
    %p175 = pnand %p173, %p174
    %p176 = pneg %p175
    // Predicated region
    $region33: #{tpu_custom_call.1} parent=5 // pred_check
      _
    $region34: #{tpu_custom_call.1} parent=5 // pred_check_branch
      %178 = sbr.rel (%p175) target = $region36
    $region35: #{tpu_custom_call.1} parent=5 // pred_region
      %s179 = ssub.s32 %s10, 1
      %s180 = smul.u32 10, %s15
      %p181 = scmp.lt.s32.totalorder %s180, 39
      %s182 = scalar_select %p181, %s180, 39
      %s183 = smul.addr %s182, 8
      %s184 = scalar_lea.vmem %s0, %s183
      %p185 = pneg %p36
      %p186 = pneg %p33
      %s187 = smul.u32 10, %s15
      %p188 = scmp.lt.s32.totalorder %s187, 39
      %s189 = scalar_select %p188, %s187, 39
      %s190 = smul.addr %s189, 8
      %s191 = scalar_lea.vmem %s1, %s190
      %p192 = pneg %p62
      %p193 = pneg %p59
      %p194 = pneg %p83
      %p195 = pneg %p80
      %p196 = pneg %p104
      %p197 = pneg %p101
      %p198 = pneg %p130
      %p199 = pneg %p127
      %s200 = smul.u32 2, %s15
      %p201 = scmp.lt.s32.totalorder %s200, 7
      %s202 = scalar_select %p201, %s200, 7
      %s203 = smul.addr %s202, 8
      %s204 = scalar_lea.vmem %s4, %s203
      %s205 = smul.u32 10, %s15
      %p206 = scmp.lt.s32.totalorder %s205, 39
      %s207 = scalar_select %p206, %s205, 39
      %s208 = smul.addr %s207, 8
      %s209 = scalar_lea.vmem %s0, %s208
      %s210 = smul.u32 10, %s15
      %s211 = smul.u32 10, %s15
      %p212 = scmp.lt.s32.totalorder %s211, 39
      %s213 = scalar_select %p212, %s211, 39
      %s214 = smul.addr %s213, 8
      %s215 = scalar_lea.vmem %s1, %s214
      %s216 = smul.u32 10, %s15
      %s217 = smul.u32 2, %s15
      %p218 = scmp.lt.s32.totalorder %s217, 7
      %s219 = scalar_select %p218, %s217, 7
      %s220 = smul.addr %s219, 8
      %s221 = scalar_lea.vmem %s4, %s220
      %s222 = smul.u32 2, %s15
      %v223 = vld [vmem:[%s209] sm:$0xff]
      %v224 = vld [vmem:[%s209 + $0x8] sm:$0xff]
      %v225 = vld [vmem:[%s209 + $0x10] sm:$0xff]
      %v226 = vld [vmem:[%s209 + $0x18] sm:$0xff]
      %v227 = vld [vmem:[%s209 + $0x20] sm:$0xff]
      %v228 = vld [vmem:[%s209 + $0x28] sm:$0xff]
      %v229 = vld [vmem:[%s209 + $0x30] sm:$0xff]
      %v230 = vld [vmem:[%s209 + $0x38] sm:$0xff]
      %v231 = vld [vmem:[%s209 + $0x40] sm:$0xff]
      %v232 = vld [vmem:[%s209 + $0x48] sm:$0xff]
      %v233 = vld [vmem:[%s215] sm:$0xff]
      %v234 = vld [vmem:[%s215 + $0x8] sm:$0xff]
      %v235 = vld [vmem:[%s215 + $0x10] sm:$0xff]
      %v236 = vld [vmem:[%s215 + $0x18] sm:$0xff]
      %v237 = vld [vmem:[%s215 + $0x20] sm:$0xff]
      %v238 = vld [vmem:[%s215 + $0x28] sm:$0xff]
      %v239 = vld [vmem:[%s215 + $0x30] sm:$0xff]
      %v240 = vld [vmem:[%s215 + $0x38] sm:$0xff]
      %v241 = vld [vmem:[%s215 + $0x40] sm:$0xff]
      %v242 = vld [vmem:[%s215 + $0x48] sm:$0xff]
      %v243 = vld [vmem:[%s2] sm:$0xff]
      %v244 = vld [vmem:[%s2 + $0x8] sm:$0xff]
      %vm245 = vcmask 130048
      %v247 = vsel %vm245, %v223, 0
      %v250 = vsel %vm245, %v224, 0
      %v253 = vsel %vm245, %v225, 0
      %v256 = vsel %vm245, %v226, 0
      %v259 = vsel %vm245, %v227, 0
      %v262 = vsel %vm245, %v228, 0
      %v265 = vsel %vm245, %v229, 0
      %v268 = vsel %vm245, %v230, 0
      %v271 = vsel %vm245, %v231, 0
      %v274 = vsel %vm245, %v232, 0
      %276 = vmatprep.subr.mxu0 0.0
      %277 = vmatpush1.msra.mxu0 0.0
      %278 = vmatprep.subr.mxu0 0.0
      %279 = vmatpush1.msra.mxu0 0.0
      %280 = vmatprep.subr.mxu0 0.0
      %281 = vmatpush1.msra.mxu0 0.0
      %282 = vmatprep.subr.mxu0 0.0
      %283 = vmatpush1.msra.mxu0 0.0
      %284 = vmatprep.subr.mxu0 0.0
      %285 = vmatpush1.msra.mxu0 0.0
      %286 = vmatprep.subr.mxu0 0.0
      %287 = vmatpush1.msra.mxu0 0.0
      %288 = vmatprep.subr.mxu0 0.0
      %289 = vmatpush1.msra.mxu0 0.0
      %290 = vmatprep.subr.mxu0 0.0
      %291 = vmatpush1.msra.mxu0 0.0
      %292 = vmatprep.subr.mxu0 0.0
      %293 = vmatpush1.msra.mxu0 0.0
      %294 = vmatprep.subr.mxu0 0.0
      %295 = vmatpush1.msra.mxu0 0.0
      %296 = vmatprep.subr.mxu0 0.0
      %297 = vmatpush1.msra.mxu0 0.0
      %298 = vmatprep.subr.mxu0 0.0
      %299 = vmatpush1.msra.mxu0 0.0
      %300 = vmatprep.subr.mxu0 0.0
      %301 = vmatpush1.msra.mxu0 0.0
      %302 = vmatprep.subr.mxu0 0.0
      %303 = vmatpush1.msra.mxu0 0.0
      %304 = vmatprep.subr.mxu0 0.0
      %305 = vmatpush1.msra.mxu0 %v244
      %306 = vmatprep.subr.mxu0 0.0
      %307 = vmatpush1.msra.mxu0 %v243
      %308 = vmatprep.subr.mxu0 0.0
      %309 = vmatpush2.msra.mxu0 0.0
      %310 = vmatprep.subr.mxu0 0.0
      %311 = vmatpush2.msra.mxu0 0.0
      %312 = vmatprep.subr.mxu0 0.0
      %313 = vmatpush2.msra.mxu0 0.0
      %314 = vmatprep.subr.mxu0 0.0
      %315 = vmatpush2.msra.mxu0 0.0
      %316 = vmatprep.subr.mxu0 0.0
      %317 = vmatpush2.msra.mxu0 0.0
      %318 = vmatprep.subr.mxu0 0.0
      %319 = vmatpush2.msra.mxu0 0.0
      %320 = vmatprep.subr.mxu0 0.0
      %321 = vmatpush2.msra.mxu0 0.0
      %322 = vmatprep.subr.mxu0 0.0
      %323 = vmatpush2.msra.mxu0 0.0
      %324 = vmatprep.subr.mxu0 0.0
      %325 = vmatpush2.msra.mxu0 0.0
      %326 = vmatprep.subr.mxu0 0.0
      %327 = vmatpush2.msra.mxu0 0.0
      %328 = vmatprep.subr.mxu0 0.0
      %329 = vmatpush2.msra.mxu0 0.0
      %330 = vmatprep.subr.mxu0 0.0
      %331 = vmatpush2.msra.mxu0 0.0
      %332 = vmatprep.subr.mxu0 0.0
      %333 = vmatpush2.msra.mxu0 0.0
      %334 = vmatprep.subr.mxu0 0.0
      %335 = vmatpush2.msra.mxu0 0.0
      %336 = vmatprep.subr.mxu0 0.0
      %337 = vmatpush2.msra.mxu0 0.0
      %338 = vmatprep.subr.mxu0 0.0
      %339 = vmatpush2.msra.mxu0 0.0
      %340 = vmatprep.mubr.f32.mxu0 0.0
      %341 = vmatmul.mubr.f32.gmra.mxu0 %v247
      %v342 = vpop.f32.mrf.mxu0
      %v343 = vadd.f32 0.0, %v342
      %v344 = vpop.f32.mrf.mxu0
      %345 = vmatprep.mubr.f32.mxu0 0.0
      %346 = vmatmul.mubr.f32.gmra.mxu0 %v250
      %v347 = vpop.f32.mrf.mxu0
      %v348 = vadd.f32 0.0, %v347
      %v349 = vpop.f32.mrf.mxu0
      %350 = vmatprep.mubr.f32.mxu0 0.0
      %351 = vmatmul.mubr.f32.gmra.mxu0 %v253
      %v352 = vpop.f32.mrf.mxu0
      %v353 = vadd.f32 0.0, %v352
      %v354 = vpop.f32.mrf.mxu0
      %355 = vmatprep.mubr.f32.mxu0 0.0
      %356 = vmatmul.mubr.f32.gmra.mxu0 %v256
      %v357 = vpop.f32.mrf.mxu0
      %v358 = vadd.f32 0.0, %v357
      %v359 = vpop.f32.mrf.mxu0
      %360 = vmatprep.mubr.f32.mxu0 0.0
      %361 = vmatmul.mubr.f32.gmra.mxu0 %v259
      %v362 = vpop.f32.mrf.mxu0
      %v363 = vadd.f32 0.0, %v362
      %v364 = vpop.f32.mrf.mxu0
      %365 = vmatprep.mubr.f32.mxu0 0.0
      %366 = vmatmul.mubr.f32.gmra.mxu0 %v262
      %v367 = vpop.f32.mrf.mxu0
      %v368 = vadd.f32 0.0, %v367
      %v369 = vpop.f32.mrf.mxu0
      %370 = vmatprep.mubr.f32.mxu0 0.0
      %371 = vmatmul.mubr.f32.gmra.mxu0 %v265
      %v372 = vpop.f32.mrf.mxu0
      %v373 = vadd.f32 0.0, %v372
      %v374 = vpop.f32.mrf.mxu0
      %375 = vmatprep.mubr.f32.mxu0 0.0
      %376 = vmatmul.mubr.f32.gmra.mxu0 %v268
      %v377 = vpop.f32.mrf.mxu0
      %v378 = vadd.f32 0.0, %v377
      %v379 = vpop.f32.mrf.mxu0
      %380 = vmatprep.mubr.f32.mxu0 0.0
      %381 = vmatmul.mubr.f32.gmra.mxu0 %v271
      %v382 = vpop.f32.mrf.mxu0
      %v383 = vadd.f32 0.0, %v382
      %v384 = vpop.f32.mrf.mxu0
      %385 = vmatprep.mubr.f32.mxu0 0.0
      %386 = vmatmul.mubr.f32.gmra.mxu0 %v274
      %v387 = vpop.f32.mrf.mxu0
      %v388 = vadd.f32 0.0, %v387
      %v389 = vpop.f32.mrf.mxu0
      %390 = vdwg.mxu0
      %v391 = vld [vmem:[%s2 + $0x11] sm:$0xf]
      %v393 = vsel %vm245, %v391, 0
      %395 = vmatprep.subr.mxu0 0.0
      %396 = vmatpush1.xpose.msra.mxu0 0.0
      %397 = vmatprep.subr.mxu0 0.0
      %398 = vmatpush1.xpose.msra.mxu0 0.0
      %399 = vmatprep.subr.mxu0 0.0
      %400 = vmatpush1.xpose.msra.mxu0 0.0
      %401 = vmatprep.subr.mxu0 0.0
      %402 = vmatpush1.xpose.msra.mxu0 0.0
      %403 = vmatprep.subr.mxu0 0.0
      %404 = vmatpush1.xpose.msra.mxu0 0.0
      %405 = vmatprep.subr.mxu0 0.0
      %406 = vmatpush1.xpose.msra.mxu0 0.0
      %407 = vmatprep.subr.mxu0 0.0
      %408 = vmatpush1.xpose.msra.mxu0 %v274
      %409 = vmatprep.subr.mxu0 0.0
      %410 = vmatpush1.xpose.msra.mxu0 %v271
      %411 = vmatprep.subr.mxu0 0.0
      %412 = vmatpush1.xpose.msra.mxu0 %v268
      %413 = vmatprep.subr.mxu0 0.0
      %414 = vmatpush1.xpose.msra.mxu0 %v265
      %415 = vmatprep.subr.mxu0 0.0
      %416 = vmatpush1.xpose.msra.mxu0 %v262
      %417 = vmatprep.subr.mxu0 0.0
      %418 = vmatpush1.xpose.msra.mxu0 %v259
      %419 = vmatprep.subr.mxu0 0.0
      %420 = vmatpush1.xpose.msra.mxu0 %v256
      %421 = vmatprep.subr.mxu0 0.0
      %422 = vmatpush1.xpose.msra.mxu0 %v253
      %423 = vmatprep.subr.mxu0 0.0
      %424 = vmatpush1.xpose.msra.mxu0 %v250
      %425 = vmatprep.subr.mxu0 0.0
      %426 = vmatpush1.xpose.msra.mxu0 %v247
      %427 = vmatprep.subr.mxu0 0.0
      %428 = vmatpush2.xpose.msra.mxu0 0.0
      %429 = vmatprep.subr.mxu0 0.0
      %430 = vmatpush2.xpose.msra.mxu0 0.0
      %431 = vmatprep.subr.mxu0 0.0
      %432 = vmatpush2.xpose.msra.mxu0 0.0
      %433 = vmatprep.subr.mxu0 0.0
      %434 = vmatpush2.xpose.msra.mxu0 0.0
      %435 = vmatprep.subr.mxu0 0.0
      %436 = vmatpush2.xpose.msra.mxu0 0.0
      %437 = vmatprep.subr.mxu0 0.0
      %438 = vmatpush2.xpose.msra.mxu0 0.0
      %439 = vmatprep.subr.mxu0 0.0
      %440 = vmatpush2.xpose.msra.mxu0 0.0
      %441 = vmatprep.subr.mxu0 0.0
      %442 = vmatpush2.xpose.msra.mxu0 0.0
      %443 = vmatprep.subr.mxu0 0.0
      %444 = vmatpush2.xpose.msra.mxu0 0.0
      %445 = vmatprep.subr.mxu0 0.0
      %446 = vmatpush2.xpose.msra.mxu0 0.0
      %447 = vmatprep.subr.mxu0 0.0
      %448 = vmatpush2.xpose.msra.mxu0 0.0
      %449 = vmatprep.subr.mxu0 0.0
      %450 = vmatpush2.xpose.msra.mxu0 0.0
      %451 = vmatprep.subr.mxu0 0.0
      %452 = vmatpush2.xpose.msra.mxu0 0.0
      %453 = vmatprep.subr.mxu0 0.0
      %454 = vmatpush2.xpose.msra.mxu0 0.0
      %455 = vmatprep.subr.mxu0 0.0
      %456 = vmatpush2.xpose.msra.mxu0 0.0
      %457 = vmatprep.subr.mxu0 0.0
      %458 = vmatpush2.xpose.msra.mxu0 0.0
      %459 = vmatprep.mubr.f32.mxu0 0.0
      %460 = vmatmul.mubr.f32.gmra.mxu0 %v393
      %v461 = vpop.f32.mrf.mxu0
      %v462 = vadd.f32 0.0, %v461
      %v463 = vpop.f32.mrf.mxu0
      %464 = vdwg.mxu0
      %466 = vset.pattern.permute.xlu0 32
      %467 = vperm.xlu0 %466, %v343
      %v468 = vpop.permute.xlu0 %467
      %471 = vset.pattern.permute.xlu0 32
      %472 = vperm.xlu0 %471, %v348
      %v473 = vpop.permute.xlu0 %472
      %476 = vset.pattern.permute.xlu0 32
      %477 = vperm.xlu0 %476, %v353
      %v478 = vpop.permute.xlu0 %477
      %481 = vset.pattern.permute.xlu0 32
      %482 = vperm.xlu0 %481, %v358
      %v483 = vpop.permute.xlu0 %482
      %486 = vset.pattern.permute.xlu0 32
      %487 = vperm.xlu0 %486, %v363
      %v488 = vpop.permute.xlu0 %487
      %491 = vset.pattern.permute.xlu0 32
      %492 = vperm.xlu0 %491, %v368
      %v493 = vpop.permute.xlu0 %492
      %496 = vset.pattern.permute.xlu0 32
      %497 = vperm.xlu0 %496, %v373
      %v498 = vpop.permute.xlu0 %497
      %501 = vset.pattern.permute.xlu0 32
      %502 = vperm.xlu0 %501, %v378
      %v503 = vpop.permute.xlu0 %502
      %506 = vset.pattern.permute.xlu0 32
      %507 = vperm.xlu0 %506, %v383
      %v508 = vpop.permute.xlu0 %507
      %511 = vset.pattern.permute.xlu0 32
      %512 = vperm.xlu0 %511, %v388
      %v513 = vpop.permute.xlu0 %512
      %v515 = vlaneseq
      %v516 = vshrl.u32 %v515, 7
      %v517 = vsub.s32 0, %v516
      %v518 = vrot.slane %v462, %v517
      %v519 = vadd.f32 %v468, %v518
      %v520 = vadd.f32 %v473, %v518
      %v521 = vadd.f32 %v478, %v518
      %v522 = vadd.f32 %v483, %v518
      %v523 = vadd.f32 %v488, %v518
      %v524 = vadd.f32 %v493, %v518
      %v525 = vadd.f32 %v498, %v518
      %v526 = vadd.f32 %v503, %v518
      %v527 = vadd.f32 %v508, %v518
      %v528 = vadd.f32 %v513, %v518
      %vm529 = vcmp.gt.f32.partialorder %v519, 0.0
      %vm530 = vcmp.gt.f32.partialorder %v520, 0.0
      %vm531 = vcmp.gt.f32.partialorder %v521, 0.0
      %vm532 = vcmp.gt.f32.partialorder %v522, 0.0
      %vm533 = vcmp.gt.f32.partialorder %v523, 0.0
      %vm534 = vcmp.gt.f32.partialorder %v524, 0.0
      %vm535 = vcmp.gt.f32.partialorder %v525, 0.0
      %vm536 = vcmp.gt.f32.partialorder %v526, 0.0
      %vm537 = vcmp.gt.f32.partialorder %v527, 0.0
      %vm538 = vcmp.gt.f32.partialorder %v528, 0.0
      %v539 = vmul.f32 %v519, 0.2
      %v540 = vmul.f32 %v520, 0.2
      %v541 = vmul.f32 %v521, 0.2
      %v542 = vmul.f32 %v522, 0.2
      %v543 = vmul.f32 %v523, 0.2
      %v544 = vmul.f32 %v524, 0.2
      %v545 = vmul.f32 %v525, 0.2
      %v546 = vmul.f32 %v526, 0.2
      %v547 = vmul.f32 %v527, 0.2
      %v548 = vmul.f32 %v528, 0.2
      %v549 = vsel %vm529, %v519, %v539
      %v550 = vsel %vm530, %v520, %v540
      %v551 = vsel %vm531, %v521, %v541
      %v552 = vsel %vm532, %v522, %v542
      %v553 = vsel %vm533, %v523, %v543
      %v554 = vsel %vm534, %v524, %v544
      %v555 = vsel %vm535, %v525, %v545
      %v556 = vsel %vm536, %v526, %v546
      %v557 = vsel %vm537, %v527, %v547
      %v558 = vsel %vm538, %v528, %v548
      %vm559 = vcmp.gt.f32.partialorder %v233, 0.0
      %vm560 = vcmp.gt.f32.partialorder %v234, 0.0
      %vm561 = vcmp.gt.f32.partialorder %v235, 0.0
      %vm562 = vcmp.gt.f32.partialorder %v236, 0.0
      %vm563 = vcmp.gt.f32.partialorder %v237, 0.0
      %vm564 = vcmp.gt.f32.partialorder %v238, 0.0
      %vm565 = vcmp.gt.f32.partialorder %v239, 0.0
      %vm566 = vcmp.gt.f32.partialorder %v240, 0.0
      %vm567 = vcmp.gt.f32.partialorder %v241, 0.0
      %vm568 = vcmp.gt.f32.partialorder %v242, 0.0
      %v569 = vsel %vm559, %v549, -1e+30
      %v570 = vsel %vm560, %v550, -1e+30
      %v571 = vsel %vm561, %v551, -1e+30
      %v572 = vsel %vm562, %v552, -1e+30
      %v573 = vsel %vm563, %v553, -1e+30
      %v574 = vsel %vm564, %v554, -1e+30
      %v575 = vsel %vm565, %v555, -1e+30
      %v576 = vsel %vm566, %v556, -1e+30
      %v577 = vsel %vm567, %v557, -1e+30
      %v578 = vsel %vm568, %v558, -1e+30
      %vm579 = vcmask 654336
      %v580 = vsel %vm579, %v569, -inf
      %581 = vmax.xlane.f32.xlu0 %v580
      %v582 = vpop.xlane.xlu0 %581
      %v583 = vsel %vm579, %v570, -inf
      %584 = vmax.xlane.f32.xlu0 %v583
      %v585 = vpop.xlane.xlu0 %584
      %v586 = vsel %vm579, %v571, -inf
      %587 = vmax.xlane.f32.xlu0 %v586
      %v588 = vpop.xlane.xlu0 %587
      %v589 = vsel %vm579, %v572, -inf
      %590 = vmax.xlane.f32.xlu0 %v589
      %v591 = vpop.xlane.xlu0 %590
      %v592 = vsel %vm579, %v573, -inf
      %593 = vmax.xlane.f32.xlu0 %v592
      %v594 = vpop.xlane.xlu0 %593
      %v595 = vsel %vm579, %v574, -inf
      %596 = vmax.xlane.f32.xlu0 %v595
      %v597 = vpop.xlane.xlu0 %596
      %v598 = vsel %vm579, %v575, -inf
      %599 = vmax.xlane.f32.xlu0 %v598
      %v600 = vpop.xlane.xlu0 %599
      %v601 = vsel %vm579, %v576, -inf
      %602 = vmax.xlane.f32.xlu0 %v601
      %v603 = vpop.xlane.xlu0 %602
      %v604 = vsel %vm579, %v577, -inf
      %605 = vmax.xlane.f32.xlu0 %v604
      %v606 = vpop.xlane.xlu0 %605
      %v607 = vsel %vm579, %v578, -inf
      %608 = vmax.xlane.f32.xlu0 %v607
      %v609 = vpop.xlane.xlu0 %608
      %v610 = vsub.f32 %v569, %v582
      %v611 = vsub.f32 %v570, %v585
      %v612 = vsub.f32 %v571, %v588
      %v613 = vsub.f32 %v572, %v591
      %v614 = vsub.f32 %v573, %v594
      %v615 = vsub.f32 %v574, %v597
      %v616 = vsub.f32 %v575, %v600
      %v617 = vsub.f32 %v576, %v603
      %v618 = vsub.f32 %v577, %v606
      %v619 = vsub.f32 %v578, %v609
      %v620 = vmul.f32 %v610, 1.442695
      %v621 = vpow.pop %v620
      %v622 = vmul.f32 %v611, 1.442695
      %v623 = vpow.pop %v622
      %v624 = vmul.f32 %v612, 1.442695
      %v625 = vpow.pop %v624
      %v626 = vmul.f32 %v613, 1.442695
      %v627 = vpow.pop %v626
      %v628 = vmul.f32 %v614, 1.442695
      %v629 = vpow.pop %v628
      %v630 = vmul.f32 %v615, 1.442695
      %v631 = vpow.pop %v630
      %v632 = vmul.f32 %v616, 1.442695
      %v633 = vpow.pop %v632
      %v634 = vmul.f32 %v617, 1.442695
      %v635 = vpow.pop %v634
      %v636 = vmul.f32 %v618, 1.442695
      %v637 = vpow.pop %v636
      %v638 = vmul.f32 %v619, 1.442695
      %v639 = vpow.pop %v638
      %v640 = vmul.f32 %v621, %v233
      %v641 = vmul.f32 %v623, %v234
      %v642 = vmul.f32 %v625, %v235
      %v643 = vmul.f32 %v627, %v236
      %v644 = vmul.f32 %v629, %v237
      %v645 = vmul.f32 %v631, %v238
      %v646 = vmul.f32 %v633, %v239
      %v647 = vmul.f32 %v635, %v240
      %v648 = vmul.f32 %v637, %v241
      %v649 = vmul.f32 %v639, %v242
      %v650 = vsel %vm579, %v640, 0.0
      %651 = vadd.xlane.f32.xlu0 %v650
      %v652 = vpop.xlane.xlu0 %651
      %v653 = vsel %vm579, %v641, 0.0
      %654 = vadd.xlane.f32.xlu0 %v653
      %v655 = vpop.xlane.xlu0 %654
      %v656 = vsel %vm579, %v642, 0.0
      %657 = vadd.xlane.f32.xlu0 %v656
      %v658 = vpop.xlane.xlu0 %657
      %v659 = vsel %vm579, %v643, 0.0
      %660 = vadd.xlane.f32.xlu0 %v659
      %v661 = vpop.xlane.xlu0 %660
      %v662 = vsel %vm579, %v644, 0.0
      %663 = vadd.xlane.f32.xlu0 %v662
      %v664 = vpop.xlane.xlu0 %663
      %v665 = vsel %vm579, %v645, 0.0
      %666 = vadd.xlane.f32.xlu0 %v665
      %v667 = vpop.xlane.xlu0 %666
      %v668 = vsel %vm579, %v646, 0.0
      %669 = vadd.xlane.f32.xlu0 %v668
      %v670 = vpop.xlane.xlu0 %669
      %v671 = vsel %vm579, %v647, 0.0
      %672 = vadd.xlane.f32.xlu0 %v671
      %v673 = vpop.xlane.xlu0 %672
      %v674 = vsel %vm579, %v648, 0.0
      %675 = vadd.xlane.f32.xlu0 %v674
      %v676 = vpop.xlane.xlu0 %675
      %v677 = vsel %vm579, %v649, 0.0
      %678 = vadd.xlane.f32.xlu0 %v677
      %v679 = vpop.xlane.xlu0 %678
      %v680 = vrcp.pop %v652
      %v681 = vrcp.pop %v655
      %v682 = vrcp.pop %v658
      %v683 = vrcp.pop %v661
      %v684 = vrcp.pop %v664
      %v685 = vrcp.pop %v667
      %v686 = vrcp.pop %v670
      %v687 = vrcp.pop %v673
      %v688 = vrcp.pop %v676
      %v689 = vrcp.pop %v679
      %v690 = vmul.f32 %v640, %v680
      %v691 = vmul.f32 %v641, %v681
      %v692 = vmul.f32 %v642, %v682
      %v693 = vmul.f32 %v643, %v683
      %v694 = vmul.f32 %v644, %v684
      %v695 = vmul.f32 %v645, %v685
      %v696 = vmul.f32 %v646, %v686
      %v697 = vmul.f32 %v647, %v687
      %v698 = vmul.f32 %v648, %v688
      %v699 = vmul.f32 %v649, %v689
      %v701 = vsel %vm579, %v690, 0
      %v704 = vsel %vm579, %v691, 0
      %v707 = vsel %vm579, %v692, 0
      %v710 = vsel %vm579, %v693, 0
      %v713 = vsel %vm579, %v694, 0
      %v716 = vsel %vm579, %v695, 0
      %v719 = vsel %vm579, %v696, 0
      %v722 = vsel %vm579, %v697, 0
      %v725 = vsel %vm579, %v698, 0
      %v728 = vsel %vm579, %v699, 0
      %730 = vmatprep.subr.mxu0 0.0
      %731 = vmatpush1.msra.mxu0 0.0
      %732 = vmatprep.subr.mxu0 0.0
      %733 = vmatpush1.msra.mxu0 0.0
      %734 = vmatprep.subr.mxu0 0.0
      %735 = vmatpush1.msra.mxu0 0.0
      %736 = vmatprep.subr.mxu0 0.0
      %737 = vmatpush1.msra.mxu0 0.0
      %738 = vmatprep.subr.mxu0 0.0
      %739 = vmatpush1.msra.mxu0 0.0
      %740 = vmatprep.subr.mxu0 0.0
      %741 = vmatpush1.msra.mxu0 0.0
      %742 = vmatprep.subr.mxu0 0.0
      %743 = vmatpush1.msra.mxu0 %v388
      %744 = vmatprep.subr.mxu0 0.0
      %745 = vmatpush1.msra.mxu0 %v383
      %746 = vmatprep.subr.mxu0 0.0
      %747 = vmatpush1.msra.mxu0 %v378
      %748 = vmatprep.subr.mxu0 0.0
      %749 = vmatpush1.msra.mxu0 %v373
      %750 = vmatprep.subr.mxu0 0.0
      %751 = vmatpush1.msra.mxu0 %v368
      %752 = vmatprep.subr.mxu0 0.0
      %753 = vmatpush1.msra.mxu0 %v363
      %754 = vmatprep.subr.mxu0 0.0
      %755 = vmatpush1.msra.mxu0 %v358
      %756 = vmatprep.subr.mxu0 0.0
      %757 = vmatpush1.msra.mxu0 %v353
      %758 = vmatprep.subr.mxu0 0.0
      %759 = vmatpush1.msra.mxu0 %v348
      %760 = vmatprep.subr.mxu0 0.0
      %761 = vmatpush1.msra.mxu0 %v343
      %762 = vmatprep.subr.mxu0 0.0
      %763 = vmatpush2.msra.mxu0 0.0
      %764 = vmatprep.subr.mxu0 0.0
      %765 = vmatpush2.msra.mxu0 0.0
      %766 = vmatprep.subr.mxu0 0.0
      %767 = vmatpush2.msra.mxu0 0.0
      %768 = vmatprep.subr.mxu0 0.0
      %769 = vmatpush2.msra.mxu0 0.0
      %770 = vmatprep.subr.mxu0 0.0
      %771 = vmatpush2.msra.mxu0 0.0
      %772 = vmatprep.subr.mxu0 0.0
      %773 = vmatpush2.msra.mxu0 0.0
      %774 = vmatprep.subr.mxu0 0.0
      %775 = vmatpush2.msra.mxu0 0.0
      %776 = vmatprep.subr.mxu0 0.0
      %777 = vmatpush2.msra.mxu0 0.0
      %778 = vmatprep.subr.mxu0 0.0
      %779 = vmatpush2.msra.mxu0 0.0
      %780 = vmatprep.subr.mxu0 0.0
      %781 = vmatpush2.msra.mxu0 0.0
      %782 = vmatprep.subr.mxu0 0.0
      %783 = vmatpush2.msra.mxu0 0.0
      %784 = vmatprep.subr.mxu0 0.0
      %785 = vmatpush2.msra.mxu0 0.0
      %786 = vmatprep.subr.mxu0 0.0
      %787 = vmatpush2.msra.mxu0 0.0
      %788 = vmatprep.subr.mxu0 0.0
      %789 = vmatpush2.msra.mxu0 0.0
      %790 = vmatprep.subr.mxu0 0.0
      %791 = vmatpush2.msra.mxu0 0.0
      %792 = vmatprep.subr.mxu0 0.0
      %793 = vmatpush2.msra.mxu0 0.0
      %794 = vmatprep.mubr.f32.mxu0 0.0
      %795 = vmatmul.mubr.f32.gmra.mxu0 %v701
      %v796 = vpop.f32.mrf.mxu0
      %v797 = vadd.f32 0.0, %v796
      %v798 = vpop.f32.mrf.mxu0
      %799 = vmatprep.mubr.f32.mxu0 0.0
      %800 = vmatmul.mubr.f32.gmra.mxu0 %v704
      %v801 = vpop.f32.mrf.mxu0
      %v802 = vadd.f32 0.0, %v801
      %v803 = vpop.f32.mrf.mxu0
      %804 = vmatprep.mubr.f32.mxu0 0.0
      %805 = vmatmul.mubr.f32.gmra.mxu0 %v707
      %v806 = vpop.f32.mrf.mxu0
      %v807 = vadd.f32 0.0, %v806
      %v808 = vpop.f32.mrf.mxu0
      %809 = vmatprep.mubr.f32.mxu0 0.0
      %810 = vmatmul.mubr.f32.gmra.mxu0 %v710
      %v811 = vpop.f32.mrf.mxu0
      %v812 = vadd.f32 0.0, %v811
      %v813 = vpop.f32.mrf.mxu0
      %814 = vmatprep.mubr.f32.mxu0 0.0
      %815 = vmatmul.mubr.f32.gmra.mxu0 %v713
      %v816 = vpop.f32.mrf.mxu0
      %v817 = vadd.f32 0.0, %v816
      %v818 = vpop.f32.mrf.mxu0
      %819 = vmatprep.mubr.f32.mxu0 0.0
      %820 = vmatmul.mubr.f32.gmra.mxu0 %v716
      %v821 = vpop.f32.mrf.mxu0
      %v822 = vadd.f32 0.0, %v821
      %v823 = vpop.f32.mrf.mxu0
      %824 = vmatprep.mubr.f32.mxu0 0.0
      %825 = vmatmul.mubr.f32.gmra.mxu0 %v719
      %v826 = vpop.f32.mrf.mxu0
      %v827 = vadd.f32 0.0, %v826
      %v828 = vpop.f32.mrf.mxu0
      %829 = vmatprep.mubr.f32.mxu0 0.0
      %830 = vmatmul.mubr.f32.gmra.mxu0 %v722
      %v831 = vpop.f32.mrf.mxu0
      %v832 = vadd.f32 0.0, %v831
      %v833 = vpop.f32.mrf.mxu0
      %834 = vmatprep.mubr.f32.mxu0 0.0
      %835 = vmatmul.mubr.f32.gmra.mxu0 %v725
      %v836 = vpop.f32.mrf.mxu0
      %v837 = vadd.f32 0.0, %v836
      %v838 = vpop.f32.mrf.mxu0
      %839 = vmatprep.mubr.f32.mxu0 0.0
      %840 = vmatmul.mubr.f32.gmra.mxu0 %v728
      %v841 = vpop.f32.mrf.mxu0
      %v842 = vadd.f32 0.0, %v841
      %v843 = vpop.f32.mrf.mxu0
      %844 = vdwg.mxu0
      %vm845 = vcmask 64512
      %846 = vst.msk [vmem:[#allocation2] sm:$0xff] %vm845, %v797
      %847 = vst.msk [vmem:[#allocation2 + $0x8] sm:$0xff] %vm845, %v802
      %848 = vst.msk [vmem:[#allocation2 + $0x10] sm:$0xff] %vm845, %v807
      %849 = vst.msk [vmem:[#allocation2 + $0x18] sm:$0xff] %vm845, %v812
      %850 = vst.msk [vmem:[#allocation2 + $0x20] sm:$0xff] %vm845, %v817
      %851 = vst.msk [vmem:[#allocation2 + $0x28] sm:$0xff] %vm845, %v822
      %852 = vst.msk [vmem:[#allocation2 + $0x30] sm:$0xff] %vm845, %v827
      %853 = vst.msk [vmem:[#allocation2 + $0x38] sm:$0xff] %vm845, %v832
      %854 = vst.msk [vmem:[#allocation2 + $0x40] sm:$0xff] %vm845, %v837
      %855 = vst.msk [vmem:[#allocation2 + $0x48] sm:$0xff] %vm845, %v842
      %856 = vset.pattern.permute.xlu0 33
      %857 = vperm.xlu0 %856, %v343
      %v858 = vpop.permute.xlu0 %857
      %860 = vset.pattern.permute.xlu0 33
      %861 = vperm.xlu0 %860, %v348
      %v862 = vpop.permute.xlu0 %861
      %864 = vset.pattern.permute.xlu0 33
      %865 = vperm.xlu0 %864, %v353
      %v866 = vpop.permute.xlu0 %865
      %868 = vset.pattern.permute.xlu0 33
      %869 = vperm.xlu0 %868, %v358
      %v870 = vpop.permute.xlu0 %869
      %872 = vset.pattern.permute.xlu0 33
      %873 = vperm.xlu0 %872, %v363
      %v874 = vpop.permute.xlu0 %873
      %876 = vset.pattern.permute.xlu0 33
      %877 = vperm.xlu0 %876, %v368
      %v878 = vpop.permute.xlu0 %877
      %880 = vset.pattern.permute.xlu0 33
      %881 = vperm.xlu0 %880, %v373
      %v882 = vpop.permute.xlu0 %881
      %884 = vset.pattern.permute.xlu0 33
      %885 = vperm.xlu0 %884, %v378
      %v886 = vpop.permute.xlu0 %885
      %888 = vset.pattern.permute.xlu0 33
      %889 = vperm.xlu0 %888, %v383
      %v890 = vpop.permute.xlu0 %889
      %892 = vset.pattern.permute.xlu0 33
      %893 = vperm.xlu0 %892, %v388
      %v894 = vpop.permute.xlu0 %893
      %v896 = vlaneseq
      %v897 = vshrl.u32 %v896, 7
      %v898 = vsub.s32 1, %v897
      %v899 = vrot.slane %v462, %v898
      %v900 = vadd.f32 %v858, %v899
      %v901 = vadd.f32 %v862, %v899
      %v902 = vadd.f32 %v866, %v899
      %v903 = vadd.f32 %v870, %v899
      %v904 = vadd.f32 %v874, %v899
      %v905 = vadd.f32 %v878, %v899
      %v906 = vadd.f32 %v882, %v899
      %v907 = vadd.f32 %v886, %v899
      %v908 = vadd.f32 %v890, %v899
      %v909 = vadd.f32 %v894, %v899
      %vm910 = vcmp.gt.f32.partialorder %v900, 0.0
      %vm911 = vcmp.gt.f32.partialorder %v901, 0.0
      %vm912 = vcmp.gt.f32.partialorder %v902, 0.0
      %vm913 = vcmp.gt.f32.partialorder %v903, 0.0
      %vm914 = vcmp.gt.f32.partialorder %v904, 0.0
      %vm915 = vcmp.gt.f32.partialorder %v905, 0.0
      %vm916 = vcmp.gt.f32.partialorder %v906, 0.0
      %vm917 = vcmp.gt.f32.partialorder %v907, 0.0
      %vm918 = vcmp.gt.f32.partialorder %v908, 0.0
      %vm919 = vcmp.gt.f32.partialorder %v909, 0.0
      %v920 = vmul.f32 %v900, 0.2
      %v921 = vmul.f32 %v901, 0.2
      %v922 = vmul.f32 %v902, 0.2
      %v923 = vmul.f32 %v903, 0.2
      %v924 = vmul.f32 %v904, 0.2
      %v925 = vmul.f32 %v905, 0.2
      %v926 = vmul.f32 %v906, 0.2
      %v927 = vmul.f32 %v907, 0.2
      %v928 = vmul.f32 %v908, 0.2
      %v929 = vmul.f32 %v909, 0.2
      %v930 = vsel %vm910, %v900, %v920
      %v931 = vsel %vm911, %v901, %v921
      %v932 = vsel %vm912, %v902, %v922
      %v933 = vsel %vm913, %v903, %v923
      %v934 = vsel %vm914, %v904, %v924
      %v935 = vsel %vm915, %v905, %v925
      %v936 = vsel %vm916, %v906, %v926
      %v937 = vsel %vm917, %v907, %v927
      %v938 = vsel %vm918, %v908, %v928
      %v939 = vsel %vm919, %v909, %v929
      %v940 = vsel %vm559, %v930, -1e+30
      %v941 = vsel %vm560, %v931, -1e+30
      %v942 = vsel %vm561, %v932, -1e+30
      %v943 = vsel %vm562, %v933, -1e+30
      %v944 = vsel %vm563, %v934, -1e+30
      %v945 = vsel %vm564, %v935, -1e+30
      %v946 = vsel %vm565, %v936, -1e+30
      %v947 = vsel %vm566, %v937, -1e+30
      %v948 = vsel %vm567, %v938, -1e+30
      %v949 = vsel %vm568, %v939, -1e+30
      %v950 = vsel %vm579, %v940, -inf
      %951 = vmax.xlane.f32.xlu0 %v950
      %v952 = vpop.xlane.xlu0 %951
      %v953 = vsel %vm579, %v941, -inf
      %954 = vmax.xlane.f32.xlu0 %v953
      %v955 = vpop.xlane.xlu0 %954
      %v956 = vsel %vm579, %v942, -inf
      %957 = vmax.xlane.f32.xlu0 %v956
      %v958 = vpop.xlane.xlu0 %957
      %v959 = vsel %vm579, %v943, -inf
      %960 = vmax.xlane.f32.xlu0 %v959
      %v961 = vpop.xlane.xlu0 %960
      %v962 = vsel %vm579, %v944, -inf
      %963 = vmax.xlane.f32.xlu0 %v962
      %v964 = vpop.xlane.xlu0 %963
      %v965 = vsel %vm579, %v945, -inf
      %966 = vmax.xlane.f32.xlu0 %v965
      %v967 = vpop.xlane.xlu0 %966
      %v968 = vsel %vm579, %v946, -inf
      %969 = vmax.xlane.f32.xlu0 %v968
      %v970 = vpop.xlane.xlu0 %969
      %v971 = vsel %vm579, %v947, -inf
      %972 = vmax.xlane.f32.xlu0 %v971
      %v973 = vpop.xlane.xlu0 %972
      %v974 = vsel %vm579, %v948, -inf
      %975 = vmax.xlane.f32.xlu0 %v974
      %v976 = vpop.xlane.xlu0 %975
      %v977 = vsel %vm579, %v949, -inf
      %978 = vmax.xlane.f32.xlu0 %v977
      %v979 = vpop.xlane.xlu0 %978
      %v980 = vsub.f32 %v940, %v952
      %v981 = vsub.f32 %v941, %v955
      %v982 = vsub.f32 %v942, %v958
      %v983 = vsub.f32 %v943, %v961
      %v984 = vsub.f32 %v944, %v964
      %v985 = vsub.f32 %v945, %v967
      %v986 = vsub.f32 %v946, %v970
      %v987 = vsub.f32 %v947, %v973
      %v988 = vsub.f32 %v948, %v976
      %v989 = vsub.f32 %v949, %v979
      %v990 = vmul.f32 %v980, 1.442695
      %v991 = vpow.pop %v990
      %v992 = vmul.f32 %v981, 1.442695
      %v993 = vpow.pop %v992
      %v994 = vmul.f32 %v982, 1.442695
      %v995 = vpow.pop %v994
      %v996 = vmul.f32 %v983, 1.442695
      %v997 = vpow.pop %v996
      %v998 = vmul.f32 %v984, 1.442695
      %v999 = vpow.pop %v998
      %v1000 = vmul.f32 %v985, 1.442695
      %v1001 = vpow.pop %v1000
      %v1002 = vmul.f32 %v986, 1.442695
      %v1003 = vpow.pop %v1002
      %v1004 = vmul.f32 %v987, 1.442695
      %v1005 = vpow.pop %v1004
      %v1006 = vmul.f32 %v988, 1.442695
      %v1007 = vpow.pop %v1006
      %v1008 = vmul.f32 %v989, 1.442695
      %v1009 = vpow.pop %v1008
      %v1010 = vmul.f32 %v991, %v233
      %v1011 = vmul.f32 %v993, %v234
      %v1012 = vmul.f32 %v995, %v235
      %v1013 = vmul.f32 %v997, %v236
      %v1014 = vmul.f32 %v999, %v237
      %v1015 = vmul.f32 %v1001, %v238
      %v1016 = vmul.f32 %v1003, %v239
      %v1017 = vmul.f32 %v1005, %v240
      %v1018 = vmul.f32 %v1007, %v241
      %v1019 = vmul.f32 %v1009, %v242
      %v1020 = vsel %vm579, %v1010, 0.0
      %1021 = vadd.xlane.f32.xlu0 %v1020
      %v1022 = vpop.xlane.xlu0 %1021
      %v1023 = vsel %vm579, %v1011, 0.0
      %1024 = vadd.xlane.f32.xlu0 %v1023
      %v1025 = vpop.xlane.xlu0 %1024
      %v1026 = vsel %vm579, %v1012, 0.0
      %1027 = vadd.xlane.f32.xlu0 %v1026
      %v1028 = vpop.xlane.xlu0 %1027
      %v1029 = vsel %vm579, %v1013, 0.0
      %1030 = vadd.xlane.f32.xlu0 %v1029
      %v1031 = vpop.xlane.xlu0 %1030
      %v1032 = vsel %vm579, %v1014, 0.0
      %1033 = vadd.xlane.f32.xlu0 %v1032
      %v1034 = vpop.xlane.xlu0 %1033
      %v1035 = vsel %vm579, %v1015, 0.0
      %1036 = vadd.xlane.f32.xlu0 %v1035
      %v1037 = vpop.xlane.xlu0 %1036
      %v1038 = vsel %vm579, %v1016, 0.0
      %1039 = vadd.xlane.f32.xlu0 %v1038
      %v1040 = vpop.xlane.xlu0 %1039
      %v1041 = vsel %vm579, %v1017, 0.0
      %1042 = vadd.xlane.f32.xlu0 %v1041
      %v1043 = vpop.xlane.xlu0 %1042
      %v1044 = vsel %vm579, %v1018, 0.0
      %1045 = vadd.xlane.f32.xlu0 %v1044
      %v1046 = vpop.xlane.xlu0 %1045
      %v1047 = vsel %vm579, %v1019, 0.0
      %1048 = vadd.xlane.f32.xlu0 %v1047
      %v1049 = vpop.xlane.xlu0 %1048
      %v1050 = vrcp.pop %v1022
      %v1051 = vrcp.pop %v1025
      %v1052 = vrcp.pop %v1028
      %v1053 = vrcp.pop %v1031
      %v1054 = vrcp.pop %v1034
      %v1055 = vrcp.pop %v1037
      %v1056 = vrcp.pop %v1040
      %v1057 = vrcp.pop %v1043
      %v1058 = vrcp.pop %v1046
      %v1059 = vrcp.pop %v1049
      %v1060 = vmul.f32 %v1010, %v1050
      %v1061 = vmul.f32 %v1011, %v1051
      %v1062 = vmul.f32 %v1012, %v1052
      %v1063 = vmul.f32 %v1013, %v1053
      %v1064 = vmul.f32 %v1014, %v1054
      %v1065 = vmul.f32 %v1015, %v1055
      %v1066 = vmul.f32 %v1016, %v1056
      %v1067 = vmul.f32 %v1017, %v1057
      %v1068 = vmul.f32 %v1018, %v1058
      %v1069 = vmul.f32 %v1019, %v1059
      %1070 = vrot.lane.b32.xlu0 %v343, 120
      %v1071 = vpop.permute.xlu0 %1070
      %1072 = vrot.lane.b32.xlu0 %v348, 120
      %v1073 = vpop.permute.xlu0 %1072
      %1074 = vrot.lane.b32.xlu0 %v353, 120
      %v1075 = vpop.permute.xlu0 %1074
      %1076 = vrot.lane.b32.xlu0 %v358, 120
      %v1077 = vpop.permute.xlu0 %1076
      %1078 = vrot.lane.b32.xlu0 %v363, 120
      %v1079 = vpop.permute.xlu0 %1078
      %1080 = vrot.lane.b32.xlu0 %v368, 120
      %v1081 = vpop.permute.xlu0 %1080
      %1082 = vrot.lane.b32.xlu0 %v373, 120
      %v1083 = vpop.permute.xlu0 %1082
      %1084 = vrot.lane.b32.xlu0 %v378, 120
      %v1085 = vpop.permute.xlu0 %1084
      %1086 = vrot.lane.b32.xlu0 %v383, 120
      %v1087 = vpop.permute.xlu0 %1086
      %1088 = vrot.lane.b32.xlu0 %v388, 120
      %v1089 = vpop.permute.xlu0 %1088
      %v1101 = vsel %vm579, %v1060, 0
      %v1104 = vsel %vm579, %v1061, 0
      %v1107 = vsel %vm579, %v1062, 0
      %v1110 = vsel %vm579, %v1063, 0
      %v1113 = vsel %vm579, %v1064, 0
      %v1116 = vsel %vm579, %v1065, 0
      %v1119 = vsel %vm579, %v1066, 0
      %v1122 = vsel %vm579, %v1067, 0
      %v1125 = vsel %vm579, %v1068, 0
      %v1128 = vsel %vm579, %v1069, 0
      %1130 = vmatprep.subr.mxu0 0.0
      %1131 = vmatpush1.msra.mxu0 0.0
      %1132 = vmatprep.subr.mxu0 0.0
      %1133 = vmatpush1.msra.mxu0 0.0
      %1134 = vmatprep.subr.mxu0 0.0
      %1135 = vmatpush1.msra.mxu0 0.0
      %1136 = vmatprep.subr.mxu0 0.0
      %1137 = vmatpush1.msra.mxu0 0.0
      %1138 = vmatprep.subr.mxu0 0.0
      %1139 = vmatpush1.msra.mxu0 0.0
      %1140 = vmatprep.subr.mxu0 0.0
      %1141 = vmatpush1.msra.mxu0 0.0
      %1142 = vmatprep.subr.mxu0 0.0
      %1143 = vmatpush1.msra.mxu0 %v1089
      %1144 = vmatprep.subr.mxu0 0.0
      %1145 = vmatpush1.msra.mxu0 %v1087
      %1146 = vmatprep.subr.mxu0 0.0
      %1147 = vmatpush1.msra.mxu0 %v1085
      %1148 = vmatprep.subr.mxu0 0.0
      %1149 = vmatpush1.msra.mxu0 %v1083
      %1150 = vmatprep.subr.mxu0 0.0
      %1151 = vmatpush1.msra.mxu0 %v1081
      %1152 = vmatprep.subr.mxu0 0.0
      %1153 = vmatpush1.msra.mxu0 %v1079
      %1154 = vmatprep.subr.mxu0 0.0
      %1155 = vmatpush1.msra.mxu0 %v1077
      %1156 = vmatprep.subr.mxu0 0.0
      %1157 = vmatpush1.msra.mxu0 %v1075
      %1158 = vmatprep.subr.mxu0 0.0
      %1159 = vmatpush1.msra.mxu0 %v1073
      %1160 = vmatprep.subr.mxu0 0.0
      %1161 = vmatpush1.msra.mxu0 %v1071
      %1162 = vmatprep.subr.mxu0 0.0
      %1163 = vmatpush2.msra.mxu0 0.0
      %1164 = vmatprep.subr.mxu0 0.0
      %1165 = vmatpush2.msra.mxu0 0.0
      %1166 = vmatprep.subr.mxu0 0.0
      %1167 = vmatpush2.msra.mxu0 0.0
      %1168 = vmatprep.subr.mxu0 0.0
      %1169 = vmatpush2.msra.mxu0 0.0
      %1170 = vmatprep.subr.mxu0 0.0
      %1171 = vmatpush2.msra.mxu0 0.0
      %1172 = vmatprep.subr.mxu0 0.0
      %1173 = vmatpush2.msra.mxu0 0.0
      %1174 = vmatprep.subr.mxu0 0.0
      %1175 = vmatpush2.msra.mxu0 0.0
      %1176 = vmatprep.subr.mxu0 0.0
      %1177 = vmatpush2.msra.mxu0 0.0
      %1178 = vmatprep.subr.mxu0 0.0
      %1179 = vmatpush2.msra.mxu0 0.0
      %1180 = vmatprep.subr.mxu0 0.0
      %1181 = vmatpush2.msra.mxu0 0.0
      %1182 = vmatprep.subr.mxu0 0.0
      %1183 = vmatpush2.msra.mxu0 0.0
      %1184 = vmatprep.subr.mxu0 0.0
      %1185 = vmatpush2.msra.mxu0 0.0
      %1186 = vmatprep.subr.mxu0 0.0
      %1187 = vmatpush2.msra.mxu0 0.0
      %1188 = vmatprep.subr.mxu0 0.0
      %1189 = vmatpush2.msra.mxu0 0.0
      %1190 = vmatprep.subr.mxu0 0.0
      %1191 = vmatpush2.msra.mxu0 0.0
      %1192 = vmatprep.subr.mxu0 0.0
      %1193 = vmatpush2.msra.mxu0 0.0
      %1194 = vmatprep.mubr.f32.mxu0 0.0
      %1195 = vmatmul.mubr.f32.gmra.mxu0 %v1101
      %v1196 = vpop.f32.mrf.mxu0
      %v1197 = vadd.f32 0.0, %v1196
      %v1198 = vpop.f32.mrf.mxu0
      %1199 = vmatprep.mubr.f32.mxu0 0.0
      %1200 = vmatmul.mubr.f32.gmra.mxu0 %v1104
      %v1201 = vpop.f32.mrf.mxu0
      %v1202 = vadd.f32 0.0, %v1201
      %v1203 = vpop.f32.mrf.mxu0
      %1204 = vmatprep.mubr.f32.mxu0 0.0
      %1205 = vmatmul.mubr.f32.gmra.mxu0 %v1107
      %v1206 = vpop.f32.mrf.mxu0
      %v1207 = vadd.f32 0.0, %v1206
      %v1208 = vpop.f32.mrf.mxu0
      %1209 = vmatprep.mubr.f32.mxu0 0.0
      %1210 = vmatmul.mubr.f32.gmra.mxu0 %v1110
      %v1211 = vpop.f32.mrf.mxu0
      %v1212 = vadd.f32 0.0, %v1211
      %v1213 = vpop.f32.mrf.mxu0
      %1214 = vmatprep.mubr.f32.mxu0 0.0
      %1215 = vmatmul.mubr.f32.gmra.mxu0 %v1113
      %v1216 = vpop.f32.mrf.mxu0
      %v1217 = vadd.f32 0.0, %v1216
      %v1218 = vpop.f32.mrf.mxu0
      %1219 = vmatprep.mubr.f32.mxu0 0.0
      %1220 = vmatmul.mubr.f32.gmra.mxu0 %v1116
      %v1221 = vpop.f32.mrf.mxu0
      %v1222 = vadd.f32 0.0, %v1221
      %v1223 = vpop.f32.mrf.mxu0
      %1224 = vmatprep.mubr.f32.mxu0 0.0
      %1225 = vmatmul.mubr.f32.gmra.mxu0 %v1119
      %v1226 = vpop.f32.mrf.mxu0
      %v1227 = vadd.f32 0.0, %v1226
      %v1228 = vpop.f32.mrf.mxu0
      %1229 = vmatprep.mubr.f32.mxu0 0.0
      %1230 = vmatmul.mubr.f32.gmra.mxu0 %v1122
      %v1231 = vpop.f32.mrf.mxu0
      %v1232 = vadd.f32 0.0, %v1231
      %v1233 = vpop.f32.mrf.mxu0
      %1234 = vmatprep.mubr.f32.mxu0 0.0
      %1235 = vmatmul.mubr.f32.gmra.mxu0 %v1125
      %v1236 = vpop.f32.mrf.mxu0
      %v1237 = vadd.f32 0.0, %v1236
      %v1238 = vpop.f32.mrf.mxu0
      %1239 = vmatprep.mubr.f32.mxu0 0.0
      %1240 = vmatmul.mubr.f32.gmra.mxu0 %v1128
      %v1241 = vpop.f32.mrf.mxu0
      %v1242 = vadd.f32 0.0, %v1241
      %v1243 = vpop.f32.mrf.mxu0
      %1244 = vdwg.mxu0
      %1255 = vrot.lane.b32.xlu0 %v1197, 8
      %v1256 = vpop.permute.xlu0 %1255
      %1257 = vrot.lane.b32.xlu0 %v1202, 8
      %v1258 = vpop.permute.xlu0 %1257
      %1259 = vrot.lane.b32.xlu0 %v1207, 8
      %v1260 = vpop.permute.xlu0 %1259
      %1261 = vrot.lane.b32.xlu0 %v1212, 8
      %v1262 = vpop.permute.xlu0 %1261
      %1263 = vrot.lane.b32.xlu0 %v1217, 8
      %v1264 = vpop.permute.xlu0 %1263
      %1265 = vrot.lane.b32.xlu0 %v1222, 8
      %v1266 = vpop.permute.xlu0 %1265
      %1267 = vrot.lane.b32.xlu0 %v1227, 8
      %v1268 = vpop.permute.xlu0 %1267
      %1269 = vrot.lane.b32.xlu0 %v1232, 8
      %v1270 = vpop.permute.xlu0 %1269
      %1271 = vrot.lane.b32.xlu0 %v1237, 8
      %v1272 = vpop.permute.xlu0 %1271
      %1273 = vrot.lane.b32.xlu0 %v1242, 8
      %v1274 = vpop.permute.xlu0 %1273
      %vm1285 = vcmask 130112
      %1286 = vst.msk [vmem:[#allocation2] sm:$0xff] %vm1285, %v1256
      %1287 = vst.msk [vmem:[#allocation2 + $0x8] sm:$0xff] %vm1285, %v1258
      %1288 = vst.msk [vmem:[#allocation2 + $0x10] sm:$0xff] %vm1285, %v1260
      %1289 = vst.msk [vmem:[#allocation2 + $0x18] sm:$0xff] %vm1285, %v1262
      %1290 = vst.msk [vmem:[#allocation2 + $0x20] sm:$0xff] %vm1285, %v1264
      %1291 = vst.msk [vmem:[#allocation2 + $0x28] sm:$0xff] %vm1285, %v1266
      %1292 = vst.msk [vmem:[#allocation2 + $0x30] sm:$0xff] %vm1285, %v1268
      %1293 = vst.msk [vmem:[#allocation2 + $0x38] sm:$0xff] %vm1285, %v1270
      %1294 = vst.msk [vmem:[#allocation2 + $0x40] sm:$0xff] %vm1285, %v1272
      %1295 = vst.msk [vmem:[#allocation2 + $0x48] sm:$0xff] %vm1285, %v1274
      %1296 = vset.pattern.permute.xlu0 34
      %1297 = vperm.xlu0 %1296, %v343
      %v1298 = vpop.permute.xlu0 %1297
      %1300 = vset.pattern.permute.xlu0 34
      %1301 = vperm.xlu0 %1300, %v348
      %v1302 = vpop.permute.xlu0 %1301
      %1304 = vset.pattern.permute.xlu0 34
      %1305 = vperm.xlu0 %1304, %v353
      %v1306 = vpop.permute.xlu0 %1305
      %1308 = vset.pattern.permute.xlu0 34
      %1309 = vperm.xlu0 %1308, %v358
      %v1310 = vpop.permute.xlu0 %1309
      %1312 = vset.pattern.permute.xlu0 34
      %1313 = vperm.xlu0 %1312, %v363
      %v1314 = vpop.permute.xlu0 %1313
      %1316 = vset.pattern.permute.xlu0 34
      %1317 = vperm.xlu0 %1316, %v368
      %v1318 = vpop.permute.xlu0 %1317
      %1320 = vset.pattern.permute.xlu0 34
      %1321 = vperm.xlu0 %1320, %v373
      %v1322 = vpop.permute.xlu0 %1321
      %1324 = vset.pattern.permute.xlu0 34
      %1325 = vperm.xlu0 %1324, %v378
      %v1326 = vpop.permute.xlu0 %1325
      %1328 = vset.pattern.permute.xlu0 34
      %1329 = vperm.xlu0 %1328, %v383
      %v1330 = vpop.permute.xlu0 %1329
      %1332 = vset.pattern.permute.xlu0 34
      %1333 = vperm.xlu0 %1332, %v388
      %v1334 = vpop.permute.xlu0 %1333
      %v1336 = vlaneseq
      %v1337 = vshrl.u32 %v1336, 7
      %v1338 = vsub.s32 2, %v1337
      %v1339 = vrot.slane %v462, %v1338
      %v1340 = vadd.f32 %v1298, %v1339
      %v1341 = vadd.f32 %v1302, %v1339
      %v1342 = vadd.f32 %v1306, %v1339
      %v1343 = vadd.f32 %v1310, %v1339
      %v1344 = vadd.f32 %v1314, %v1339
      %v1345 = vadd.f32 %v1318, %v1339
      %v1346 = vadd.f32 %v1322, %v1339
      %v1347 = vadd.f32 %v1326, %v1339
      %v1348 = vadd.f32 %v1330, %v1339
      %v1349 = vadd.f32 %v1334, %v1339
      %vm1350 = vcmp.gt.f32.partialorder %v1340, 0.0
      %vm1351 = vcmp.gt.f32.partialorder %v1341, 0.0
      %vm1352 = vcmp.gt.f32.partialorder %v1342, 0.0
      %vm1353 = vcmp.gt.f32.partialorder %v1343, 0.0
      %vm1354 = vcmp.gt.f32.partialorder %v1344, 0.0
      %vm1355 = vcmp.gt.f32.partialorder %v1345, 0.0
      %vm1356 = vcmp.gt.f32.partialorder %v1346, 0.0
      %vm1357 = vcmp.gt.f32.partialorder %v1347, 0.0
      %vm1358 = vcmp.gt.f32.partialorder %v1348, 0.0
      %vm1359 = vcmp.gt.f32.partialorder %v1349, 0.0
      %v1360 = vmul.f32 %v1340, 0.2
      %v1361 = vmul.f32 %v1341, 0.2
      %v1362 = vmul.f32 %v1342, 0.2
      %v1363 = vmul.f32 %v1343, 0.2
      %v1364 = vmul.f32 %v1344, 0.2
      %v1365 = vmul.f32 %v1345, 0.2
      %v1366 = vmul.f32 %v1346, 0.2
      %v1367 = vmul.f32 %v1347, 0.2
      %v1368 = vmul.f32 %v1348, 0.2
      %v1369 = vmul.f32 %v1349, 0.2
      %v1370 = vsel %vm1350, %v1340, %v1360
      %v1371 = vsel %vm1351, %v1341, %v1361
      %v1372 = vsel %vm1352, %v1342, %v1362
      %v1373 = vsel %vm1353, %v1343, %v1363
      %v1374 = vsel %vm1354, %v1344, %v1364
      %v1375 = vsel %vm1355, %v1345, %v1365
      %v1376 = vsel %vm1356, %v1346, %v1366
      %v1377 = vsel %vm1357, %v1347, %v1367
      %v1378 = vsel %vm1358, %v1348, %v1368
      %v1379 = vsel %vm1359, %v1349, %v1369
      %v1380 = vsel %vm559, %v1370, -1e+30
      %v1381 = vsel %vm560, %v1371, -1e+30
      %v1382 = vsel %vm561, %v1372, -1e+30
      %v1383 = vsel %vm562, %v1373, -1e+30
      %v1384 = vsel %vm563, %v1374, -1e+30
      %v1385 = vsel %vm564, %v1375, -1e+30
      %v1386 = vsel %vm565, %v1376, -1e+30
      %v1387 = vsel %vm566, %v1377, -1e+30
      %v1388 = vsel %vm567, %v1378, -1e+30
      %v1389 = vsel %vm568, %v1379, -1e+30
      %v1390 = vsel %vm579, %v1380, -inf
      %1391 = vmax.xlane.f32.xlu0 %v1390
      %v1392 = vpop.xlane.xlu0 %1391
      %v1393 = vsel %vm579, %v1381, -inf
      %1394 = vmax.xlane.f32.xlu0 %v1393
      %v1395 = vpop.xlane.xlu0 %1394
      %v1396 = vsel %vm579, %v1382, -inf
      %1397 = vmax.xlane.f32.xlu0 %v1396
      %v1398 = vpop.xlane.xlu0 %1397
      %v1399 = vsel %vm579, %v1383, -inf
      %1400 = vmax.xlane.f32.xlu0 %v1399
      %v1401 = vpop.xlane.xlu0 %1400
      %v1402 = vsel %vm579, %v1384, -inf
      %1403 = vmax.xlane.f32.xlu0 %v1402
      %v1404 = vpop.xlane.xlu0 %1403
      %v1405 = vsel %vm579, %v1385, -inf
      %1406 = vmax.xlane.f32.xlu0 %v1405
      %v1407 = vpop.xlane.xlu0 %1406
      %v1408 = vsel %vm579, %v1386, -inf
      %1409 = vmax.xlane.f32.xlu0 %v1408
      %v1410 = vpop.xlane.xlu0 %1409
      %v1411 = vsel %vm579, %v1387, -inf
      %1412 = vmax.xlane.f32.xlu0 %v1411
      %v1413 = vpop.xlane.xlu0 %1412
      %v1414 = vsel %vm579, %v1388, -inf
      %1415 = vmax.xlane.f32.xlu0 %v1414
      %v1416 = vpop.xlane.xlu0 %1415
      %v1417 = vsel %vm579, %v1389, -inf
      %1418 = vmax.xlane.f32.xlu0 %v1417
      %v1419 = vpop.xlane.xlu0 %1418
      %v1420 = vsub.f32 %v1380, %v1392
      %v1421 = vsub.f32 %v1381, %v1395
      %v1422 = vsub.f32 %v1382, %v1398
      %v1423 = vsub.f32 %v1383, %v1401
      %v1424 = vsub.f32 %v1384, %v1404
      %v1425 = vsub.f32 %v1385, %v1407
      %v1426 = vsub.f32 %v1386, %v1410
      %v1427 = vsub.f32 %v1387, %v1413
      %v1428 = vsub.f32 %v1388, %v1416
      %v1429 = vsub.f32 %v1389, %v1419
      %v1430 = vmul.f32 %v1420, 1.442695
      %v1431 = vpow.pop %v1430
      %v1432 = vmul.f32 %v1421, 1.442695
      %v1433 = vpow.pop %v1432
      %v1434 = vmul.f32 %v1422, 1.442695
      %v1435 = vpow.pop %v1434
      %v1436 = vmul.f32 %v1423, 1.442695
      %v1437 = vpow.pop %v1436
      %v1438 = vmul.f32 %v1424, 1.442695
      %v1439 = vpow.pop %v1438
      %v1440 = vmul.f32 %v1425, 1.442695
      %v1441 = vpow.pop %v1440
      %v1442 = vmul.f32 %v1426, 1.442695
      %v1443 = vpow.pop %v1442
      %v1444 = vmul.f32 %v1427, 1.442695
      %v1445 = vpow.pop %v1444
      %v1446 = vmul.f32 %v1428, 1.442695
      %v1447 = vpow.pop %v1446
      %v1448 = vmul.f32 %v1429, 1.442695
      %v1449 = vpow.pop %v1448
      %v1450 = vmul.f32 %v1431, %v233
      %v1451 = vmul.f32 %v1433, %v234
      %v1452 = vmul.f32 %v1435, %v235
      %v1453 = vmul.f32 %v1437, %v236
      %v1454 = vmul.f32 %v1439, %v237
      %v1455 = vmul.f32 %v1441, %v238
      %v1456 = vmul.f32 %v1443, %v239
      %v1457 = vmul.f32 %v1445, %v240
      %v1458 = vmul.f32 %v1447, %v241
      %v1459 = vmul.f32 %v1449, %v242
      %v1460 = vsel %vm579, %v1450, 0.0
      %1461 = vadd.xlane.f32.xlu0 %v1460
      %v1462 = vpop.xlane.xlu0 %1461
      %v1463 = vsel %vm579, %v1451, 0.0
      %1464 = vadd.xlane.f32.xlu0 %v1463
      %v1465 = vpop.xlane.xlu0 %1464
      %v1466 = vsel %vm579, %v1452, 0.0
      %1467 = vadd.xlane.f32.xlu0 %v1466
      %v1468 = vpop.xlane.xlu0 %1467
      %v1469 = vsel %vm579, %v1453, 0.0
      %1470 = vadd.xlane.f32.xlu0 %v1469
      %v1471 = vpop.xlane.xlu0 %1470
      %v1472 = vsel %vm579, %v1454, 0.0
      %1473 = vadd.xlane.f32.xlu0 %v1472
      %v1474 = vpop.xlane.xlu0 %1473
      %v1475 = vsel %vm579, %v1455, 0.0
      %1476 = vadd.xlane.f32.xlu0 %v1475
      %v1477 = vpop.xlane.xlu0 %1476
      %v1478 = vsel %vm579, %v1456, 0.0
      %1479 = vadd.xlane.f32.xlu0 %v1478
      %v1480 = vpop.xlane.xlu0 %1479
      %v1481 = vsel %vm579, %v1457, 0.0
      %1482 = vadd.xlane.f32.xlu0 %v1481
      %v1483 = vpop.xlane.xlu0 %1482
      %v1484 = vsel %vm579, %v1458, 0.0
      %1485 = vadd.xlane.f32.xlu0 %v1484
      %v1486 = vpop.xlane.xlu0 %1485
      %v1487 = vsel %vm579, %v1459, 0.0
      %1488 = vadd.xlane.f32.xlu0 %v1487
      %v1489 = vpop.xlane.xlu0 %1488
      %v1490 = vrcp.pop %v1462
      %v1491 = vrcp.pop %v1465
      %v1492 = vrcp.pop %v1468
      %v1493 = vrcp.pop %v1471
      %v1494 = vrcp.pop %v1474
      %v1495 = vrcp.pop %v1477
      %v1496 = vrcp.pop %v1480
      %v1497 = vrcp.pop %v1483
      %v1498 = vrcp.pop %v1486
      %v1499 = vrcp.pop %v1489
      %v1500 = vmul.f32 %v1450, %v1490
      %v1501 = vmul.f32 %v1451, %v1491
      %v1502 = vmul.f32 %v1452, %v1492
      %v1503 = vmul.f32 %v1453, %v1493
      %v1504 = vmul.f32 %v1454, %v1494
      %v1505 = vmul.f32 %v1455, %v1495
      %v1506 = vmul.f32 %v1456, %v1496
      %v1507 = vmul.f32 %v1457, %v1497
      %v1508 = vmul.f32 %v1458, %v1498
      %v1509 = vmul.f32 %v1459, %v1499
      %1510 = vrot.lane.b32.xlu0 %v343, 112
      %v1511 = vpop.permute.xlu0 %1510
      %1512 = vrot.lane.b32.xlu0 %v348, 112
      %v1513 = vpop.permute.xlu0 %1512
      %1514 = vrot.lane.b32.xlu0 %v353, 112
      %v1515 = vpop.permute.xlu0 %1514
      %1516 = vrot.lane.b32.xlu0 %v358, 112
      %v1517 = vpop.permute.xlu0 %1516
      %1518 = vrot.lane.b32.xlu0 %v363, 112
      %v1519 = vpop.permute.xlu0 %1518
      %1520 = vrot.lane.b32.xlu0 %v368, 112
      %v1521 = vpop.permute.xlu0 %1520
      %1522 = vrot.lane.b32.xlu0 %v373, 112
      %v1523 = vpop.permute.xlu0 %1522
      %1524 = vrot.lane.b32.xlu0 %v378, 112
      %v1525 = vpop.permute.xlu0 %1524
      %1526 = vrot.lane.b32.xlu0 %v383, 112
      %v1527 = vpop.permute.xlu0 %1526
      %1528 = vrot.lane.b32.xlu0 %v388, 112
      %v1529 = vpop.permute.xlu0 %1528
      %v1541 = vsel %vm579, %v1500, 0
      %v1544 = vsel %vm579, %v1501, 0
      %v1547 = vsel %vm579, %v1502, 0
      %v1550 = vsel %vm579, %v1503, 0
      %v1553 = vsel %vm579, %v1504, 0
      %v1556 = vsel %vm579, %v1505, 0
      %v1559 = vsel %vm579, %v1506, 0
      %v1562 = vsel %vm579, %v1507, 0
      %v1565 = vsel %vm579, %v1508, 0
      %v1568 = vsel %vm579, %v1509, 0
      %1570 = vmatprep.subr.mxu0 0.0
      %1571 = vmatpush1.msra.mxu0 0.0
      %1572 = vmatprep.subr.mxu0 0.0
      %1573 = vmatpush1.msra.mxu0 0.0
      %1574 = vmatprep.subr.mxu0 0.0
      %1575 = vmatpush1.msra.mxu0 0.0
      %1576 = vmatprep.subr.mxu0 0.0
      %1577 = vmatpush1.msra.mxu0 0.0
      %1578 = vmatprep.subr.mxu0 0.0
      %1579 = vmatpush1.msra.mxu0 0.0
      %1580 = vmatprep.subr.mxu0 0.0
      %1581 = vmatpush1.msra.mxu0 0.0
      %1582 = vmatprep.subr.mxu0 0.0
      %1583 = vmatpush1.msra.mxu0 %v1529
      %1584 = vmatprep.subr.mxu0 0.0
      %1585 = vmatpush1.msra.mxu0 %v1527
      %1586 = vmatprep.subr.mxu0 0.0
      %1587 = vmatpush1.msra.mxu0 %v1525
      %1588 = vmatprep.subr.mxu0 0.0
      %1589 = vmatpush1.msra.mxu0 %v1523
      %1590 = vmatprep.subr.mxu0 0.0
      %1591 = vmatpush1.msra.mxu0 %v1521
      %1592 = vmatprep.subr.mxu0 0.0
      %1593 = vmatpush1.msra.mxu0 %v1519
      %1594 = vmatprep.subr.mxu0 0.0
      %1595 = vmatpush1.msra.mxu0 %v1517
      %1596 = vmatprep.subr.mxu0 0.0
      %1597 = vmatpush1.msra.mxu0 %v1515
      %1598 = vmatprep.subr.mxu0 0.0
      %1599 = vmatpush1.msra.mxu0 %v1513
      %1600 = vmatprep.subr.mxu0 0.0
      %1601 = vmatpush1.msra.mxu0 %v1511
      %1602 = vmatprep.subr.mxu0 0.0
      %1603 = vmatpush2.msra.mxu0 0.0
      %1604 = vmatprep.subr.mxu0 0.0
      %1605 = vmatpush2.msra.mxu0 0.0
      %1606 = vmatprep.subr.mxu0 0.0
      %1607 = vmatpush2.msra.mxu0 0.0
      %1608 = vmatprep.subr.mxu0 0.0
      %1609 = vmatpush2.msra.mxu0 0.0
      %1610 = vmatprep.subr.mxu0 0.0
      %1611 = vmatpush2.msra.mxu0 0.0
      %1612 = vmatprep.subr.mxu0 0.0
      %1613 = vmatpush2.msra.mxu0 0.0
      %1614 = vmatprep.subr.mxu0 0.0
      %1615 = vmatpush2.msra.mxu0 0.0
      %1616 = vmatprep.subr.mxu0 0.0
      %1617 = vmatpush2.msra.mxu0 0.0
      %1618 = vmatprep.subr.mxu0 0.0
      %1619 = vmatpush2.msra.mxu0 0.0
      %1620 = vmatprep.subr.mxu0 0.0
      %1621 = vmatpush2.msra.mxu0 0.0
      %1622 = vmatprep.subr.mxu0 0.0
      %1623 = vmatpush2.msra.mxu0 0.0
      %1624 = vmatprep.subr.mxu0 0.0
      %1625 = vmatpush2.msra.mxu0 0.0
      %1626 = vmatprep.subr.mxu0 0.0
      %1627 = vmatpush2.msra.mxu0 0.0
      %1628 = vmatprep.subr.mxu0 0.0
      %1629 = vmatpush2.msra.mxu0 0.0
      %1630 = vmatprep.subr.mxu0 0.0
      %1631 = vmatpush2.msra.mxu0 0.0
      %1632 = vmatprep.subr.mxu0 0.0
      %1633 = vmatpush2.msra.mxu0 0.0
      %1634 = vmatprep.mubr.f32.mxu0 0.0
      %1635 = vmatmul.mubr.f32.gmra.mxu0 %v1541
      %v1636 = vpop.f32.mrf.mxu0
      %v1637 = vadd.f32 0.0, %v1636
      %v1638 = vpop.f32.mrf.mxu0
      %1639 = vmatprep.mubr.f32.mxu0 0.0
      %1640 = vmatmul.mubr.f32.gmra.mxu0 %v1544
      %v1641 = vpop.f32.mrf.mxu0
      %v1642 = vadd.f32 0.0, %v1641
      %v1643 = vpop.f32.mrf.mxu0
      %1644 = vmatprep.mubr.f32.mxu0 0.0
      %1645 = vmatmul.mubr.f32.gmra.mxu0 %v1547
      %v1646 = vpop.f32.mrf.mxu0
      %v1647 = vadd.f32 0.0, %v1646
      %v1648 = vpop.f32.mrf.mxu0
      %1649 = vmatprep.mubr.f32.mxu0 0.0
      %1650 = vmatmul.mubr.f32.gmra.mxu0 %v1550
      %v1651 = vpop.f32.mrf.mxu0
      %v1652 = vadd.f32 0.0, %v1651
      %v1653 = vpop.f32.mrf.mxu0
      %1654 = vmatprep.mubr.f32.mxu0 0.0
      %1655 = vmatmul.mubr.f32.gmra.mxu0 %v1553
      %v1656 = vpop.f32.mrf.mxu0
      %v1657 = vadd.f32 0.0, %v1656
      %v1658 = vpop.f32.mrf.mxu0
      %1659 = vmatprep.mubr.f32.mxu0 0.0
      %1660 = vmatmul.mubr.f32.gmra.mxu0 %v1556
      %v1661 = vpop.f32.mrf.mxu0
      %v1662 = vadd.f32 0.0, %v1661
      %v1663 = vpop.f32.mrf.mxu0
      %1664 = vmatprep.mubr.f32.mxu0 0.0
      %1665 = vmatmul.mubr.f32.gmra.mxu0 %v1559
      %v1666 = vpop.f32.mrf.mxu0
      %v1667 = vadd.f32 0.0, %v1666
      %v1668 = vpop.f32.mrf.mxu0
      %1669 = vmatprep.mubr.f32.mxu0 0.0
      %1670 = vmatmul.mubr.f32.gmra.mxu0 %v1562
      %v1671 = vpop.f32.mrf.mxu0
      %v1672 = vadd.f32 0.0, %v1671
      %v1673 = vpop.f32.mrf.mxu0
      %1674 = vmatprep.mubr.f32.mxu0 0.0
      %1675 = vmatmul.mubr.f32.gmra.mxu0 %v1565
      %v1676 = vpop.f32.mrf.mxu0
      %v1677 = vadd.f32 0.0, %v1676
      %v1678 = vpop.f32.mrf.mxu0
      %1679 = vmatprep.mubr.f32.mxu0 0.0
      %1680 = vmatmul.mubr.f32.gmra.mxu0 %v1568
      %v1681 = vpop.f32.mrf.mxu0
      %v1682 = vadd.f32 0.0, %v1681
      %v1683 = vpop.f32.mrf.mxu0
      %1684 = vdwg.mxu0
      %1695 = vrot.lane.b32.xlu0 %v1637, 16
      %v1696 = vpop.permute.xlu0 %1695
      %1697 = vrot.lane.b32.xlu0 %v1642, 16
      %v1698 = vpop.permute.xlu0 %1697
      %1699 = vrot.lane.b32.xlu0 %v1647, 16
      %v1700 = vpop.permute.xlu0 %1699
      %1701 = vrot.lane.b32.xlu0 %v1652, 16
      %v1702 = vpop.permute.xlu0 %1701
      %1703 = vrot.lane.b32.xlu0 %v1657, 16
      %v1704 = vpop.permute.xlu0 %1703
      %1705 = vrot.lane.b32.xlu0 %v1662, 16
      %v1706 = vpop.permute.xlu0 %1705
      %1707 = vrot.lane.b32.xlu0 %v1667, 16
      %v1708 = vpop.permute.xlu0 %1707
      %1709 = vrot.lane.b32.xlu0 %v1672, 16
      %v1710 = vpop.permute.xlu0 %1709
      %1711 = vrot.lane.b32.xlu0 %v1677, 16
      %v1712 = vpop.permute.xlu0 %1711
      %1713 = vrot.lane.b32.xlu0 %v1682, 16
      %v1714 = vpop.permute.xlu0 %1713
      %vm1725 = vcmask 195712
      %1726 = vst.msk [vmem:[#allocation2] sm:$0xff] %vm1725, %v1696
      %1727 = vst.msk [vmem:[#allocation2 + $0x8] sm:$0xff] %vm1725, %v1698
      %1728 = vst.msk [vmem:[#allocation2 + $0x10] sm:$0xff] %vm1725, %v1700
      %1729 = vst.msk [vmem:[#allocation2 + $0x18] sm:$0xff] %vm1725, %v1702
      %1730 = vst.msk [vmem:[#allocation2 + $0x20] sm:$0xff] %vm1725, %v1704
      %1731 = vst.msk [vmem:[#allocation2 + $0x28] sm:$0xff] %vm1725, %v1706
      %1732 = vst.msk [vmem:[#allocation2 + $0x30] sm:$0xff] %vm1725, %v1708
      %1733 = vst.msk [vmem:[#allocation2 + $0x38] sm:$0xff] %vm1725, %v1710
      %1734 = vst.msk [vmem:[#allocation2 + $0x40] sm:$0xff] %vm1725, %v1712
      %1735 = vst.msk [vmem:[#allocation2 + $0x48] sm:$0xff] %vm1725, %v1714
      %1736 = vset.pattern.permute.xlu0 35
      %1737 = vperm.xlu0 %1736, %v343
      %v1738 = vpop.permute.xlu0 %1737
      %1740 = vset.pattern.permute.xlu0 35
      %1741 = vperm.xlu0 %1740, %v348
      %v1742 = vpop.permute.xlu0 %1741
      %1744 = vset.pattern.permute.xlu0 35
      %1745 = vperm.xlu0 %1744, %v353
      %v1746 = vpop.permute.xlu0 %1745
      %1748 = vset.pattern.permute.xlu0 35
      %1749 = vperm.xlu0 %1748, %v358
      %v1750 = vpop.permute.xlu0 %1749
      %1752 = vset.pattern.permute.xlu0 35
      %1753 = vperm.xlu0 %1752, %v363
      %v1754 = vpop.permute.xlu0 %1753
      %1756 = vset.pattern.permute.xlu0 35
      %1757 = vperm.xlu0 %1756, %v368
      %v1758 = vpop.permute.xlu0 %1757
      %1760 = vset.pattern.permute.xlu0 35
      %1761 = vperm.xlu0 %1760, %v373
      %v1762 = vpop.permute.xlu0 %1761
      %1764 = vset.pattern.permute.xlu0 35
      %1765 = vperm.xlu0 %1764, %v378
      %v1766 = vpop.permute.xlu0 %1765
      %1768 = vset.pattern.permute.xlu0 35
      %1769 = vperm.xlu0 %1768, %v383
      %v1770 = vpop.permute.xlu0 %1769
      %1772 = vset.pattern.permute.xlu0 35
      %1773 = vperm.xlu0 %1772, %v388
      %v1774 = vpop.permute.xlu0 %1773
      %v1776 = vlaneseq
      %v1777 = vshrl.u32 %v1776, 7
      %v1778 = vsub.s32 3, %v1777
      %v1779 = vrot.slane %v462, %v1778
      %v1780 = vadd.f32 %v1738, %v1779
      %v1781 = vadd.f32 %v1742, %v1779
      %v1782 = vadd.f32 %v1746, %v1779
      %v1783 = vadd.f32 %v1750, %v1779
      %v1784 = vadd.f32 %v1754, %v1779
      %v1785 = vadd.f32 %v1758, %v1779
      %v1786 = vadd.f32 %v1762, %v1779
      %v1787 = vadd.f32 %v1766, %v1779
      %v1788 = vadd.f32 %v1770, %v1779
      %v1789 = vadd.f32 %v1774, %v1779
      %vm1790 = vcmp.gt.f32.partialorder %v1780, 0.0
      %vm1791 = vcmp.gt.f32.partialorder %v1781, 0.0
      %vm1792 = vcmp.gt.f32.partialorder %v1782, 0.0
      %vm1793 = vcmp.gt.f32.partialorder %v1783, 0.0
      %vm1794 = vcmp.gt.f32.partialorder %v1784, 0.0
      %vm1795 = vcmp.gt.f32.partialorder %v1785, 0.0
      %vm1796 = vcmp.gt.f32.partialorder %v1786, 0.0
      %vm1797 = vcmp.gt.f32.partialorder %v1787, 0.0
      %vm1798 = vcmp.gt.f32.partialorder %v1788, 0.0
      %vm1799 = vcmp.gt.f32.partialorder %v1789, 0.0
      %v1800 = vmul.f32 %v1780, 0.2
      %v1801 = vmul.f32 %v1781, 0.2
      %v1802 = vmul.f32 %v1782, 0.2
      %v1803 = vmul.f32 %v1783, 0.2
      %v1804 = vmul.f32 %v1784, 0.2
      %v1805 = vmul.f32 %v1785, 0.2
      %v1806 = vmul.f32 %v1786, 0.2
      %v1807 = vmul.f32 %v1787, 0.2
      %v1808 = vmul.f32 %v1788, 0.2
      %v1809 = vmul.f32 %v1789, 0.2
      %v1810 = vsel %vm1790, %v1780, %v1800
      %v1811 = vsel %vm1791, %v1781, %v1801
      %v1812 = vsel %vm1792, %v1782, %v1802
      %v1813 = vsel %vm1793, %v1783, %v1803
      %v1814 = vsel %vm1794, %v1784, %v1804
      %v1815 = vsel %vm1795, %v1785, %v1805
      %v1816 = vsel %vm1796, %v1786, %v1806
      %v1817 = vsel %vm1797, %v1787, %v1807
      %v1818 = vsel %vm1798, %v1788, %v1808
      %v1819 = vsel %vm1799, %v1789, %v1809
      %v1820 = vsel %vm559, %v1810, -1e+30
      %v1821 = vsel %vm560, %v1811, -1e+30
      %v1822 = vsel %vm561, %v1812, -1e+30
      %v1823 = vsel %vm562, %v1813, -1e+30
      %v1824 = vsel %vm563, %v1814, -1e+30
      %v1825 = vsel %vm564, %v1815, -1e+30
      %v1826 = vsel %vm565, %v1816, -1e+30
      %v1827 = vsel %vm566, %v1817, -1e+30
      %v1828 = vsel %vm567, %v1818, -1e+30
      %v1829 = vsel %vm568, %v1819, -1e+30
      %v1830 = vsel %vm579, %v1820, -inf
      %1831 = vmax.xlane.f32.xlu0 %v1830
      %v1832 = vpop.xlane.xlu0 %1831
      %v1833 = vsel %vm579, %v1821, -inf
      %1834 = vmax.xlane.f32.xlu0 %v1833
      %v1835 = vpop.xlane.xlu0 %1834
      %v1836 = vsel %vm579, %v1822, -inf
      %1837 = vmax.xlane.f32.xlu0 %v1836
      %v1838 = vpop.xlane.xlu0 %1837
      %v1839 = vsel %vm579, %v1823, -inf
      %1840 = vmax.xlane.f32.xlu0 %v1839
      %v1841 = vpop.xlane.xlu0 %1840
      %v1842 = vsel %vm579, %v1824, -inf
      %1843 = vmax.xlane.f32.xlu0 %v1842
      %v1844 = vpop.xlane.xlu0 %1843
      %v1845 = vsel %vm579, %v1825, -inf
      %1846 = vmax.xlane.f32.xlu0 %v1845
      %v1847 = vpop.xlane.xlu0 %1846
      %v1848 = vsel %vm579, %v1826, -inf
      %1849 = vmax.xlane.f32.xlu0 %v1848
      %v1850 = vpop.xlane.xlu0 %1849
      %v1851 = vsel %vm579, %v1827, -inf
      %1852 = vmax.xlane.f32.xlu0 %v1851
      %v1853 = vpop.xlane.xlu0 %1852
      %v1854 = vsel %vm579, %v1828, -inf
      %1855 = vmax.xlane.f32.xlu0 %v1854
      %v1856 = vpop.xlane.xlu0 %1855
      %v1857 = vsel %vm579, %v1829, -inf
      %1858 = vmax.xlane.f32.xlu0 %v1857
      %v1859 = vpop.xlane.xlu0 %1858
      %v1860 = vsub.f32 %v1820, %v1832
      %v1861 = vsub.f32 %v1821, %v1835
      %v1862 = vsub.f32 %v1822, %v1838
      %v1863 = vsub.f32 %v1823, %v1841
      %v1864 = vsub.f32 %v1824, %v1844
      %v1865 = vsub.f32 %v1825, %v1847
      %v1866 = vsub.f32 %v1826, %v1850
      %v1867 = vsub.f32 %v1827, %v1853
      %v1868 = vsub.f32 %v1828, %v1856
      %v1869 = vsub.f32 %v1829, %v1859
      %v1870 = vmul.f32 %v1860, 1.442695
      %v1871 = vpow.pop %v1870
      %v1872 = vmul.f32 %v1861, 1.442695
      %v1873 = vpow.pop %v1872
      %v1874 = vmul.f32 %v1862, 1.442695
      %v1875 = vpow.pop %v1874
      %v1876 = vmul.f32 %v1863, 1.442695
      %v1877 = vpow.pop %v1876
      %v1878 = vmul.f32 %v1864, 1.442695
      %v1879 = vpow.pop %v1878
      %v1880 = vmul.f32 %v1865, 1.442695
      %v1881 = vpow.pop %v1880
      %v1882 = vmul.f32 %v1866, 1.442695
      %v1883 = vpow.pop %v1882
      %v1884 = vmul.f32 %v1867, 1.442695
      %v1885 = vpow.pop %v1884
      %v1886 = vmul.f32 %v1868, 1.442695
      %v1887 = vpow.pop %v1886
      %v1888 = vmul.f32 %v1869, 1.442695
      %v1889 = vpow.pop %v1888
      %v1890 = vmul.f32 %v1871, %v233
      %v1891 = vmul.f32 %v1873, %v234
      %v1892 = vmul.f32 %v1875, %v235
      %v1893 = vmul.f32 %v1877, %v236
      %v1894 = vmul.f32 %v1879, %v237
      %v1895 = vmul.f32 %v1881, %v238
      %v1896 = vmul.f32 %v1883, %v239
      %v1897 = vmul.f32 %v1885, %v240
      %v1898 = vmul.f32 %v1887, %v241
      %v1899 = vmul.f32 %v1889, %v242
      %v1900 = vsel %vm579, %v1890, 0.0
      %1901 = vadd.xlane.f32.xlu0 %v1900
      %v1902 = vpop.xlane.xlu0 %1901
      %v1903 = vsel %vm579, %v1891, 0.0
      %1904 = vadd.xlane.f32.xlu0 %v1903
      %v1905 = vpop.xlane.xlu0 %1904
      %v1906 = vsel %vm579, %v1892, 0.0
      %1907 = vadd.xlane.f32.xlu0 %v1906
      %v1908 = vpop.xlane.xlu0 %1907
      %v1909 = vsel %vm579, %v1893, 0.0
      %1910 = vadd.xlane.f32.xlu0 %v1909
      %v1911 = vpop.xlane.xlu0 %1910
      %v1912 = vsel %vm579, %v1894, 0.0
      %1913 = vadd.xlane.f32.xlu0 %v1912
      %v1914 = vpop.xlane.xlu0 %1913
      %v1915 = vsel %vm579, %v1895, 0.0
      %1916 = vadd.xlane.f32.xlu0 %v1915
      %v1917 = vpop.xlane.xlu0 %1916
      %v1918 = vsel %vm579, %v1896, 0.0
      %1919 = vadd.xlane.f32.xlu0 %v1918
      %v1920 = vpop.xlane.xlu0 %1919
      %v1921 = vsel %vm579, %v1897, 0.0
      %1922 = vadd.xlane.f32.xlu0 %v1921
      %v1923 = vpop.xlane.xlu0 %1922
      %v1924 = vsel %vm579, %v1898, 0.0
      %1925 = vadd.xlane.f32.xlu0 %v1924
      %v1926 = vpop.xlane.xlu0 %1925
      %v1927 = vsel %vm579, %v1899, 0.0
      %1928 = vadd.xlane.f32.xlu0 %v1927
      %v1929 = vpop.xlane.xlu0 %1928
      %v1930 = vrcp.pop %v1902
      %v1931 = vrcp.pop %v1905
      %v1932 = vrcp.pop %v1908
      %v1933 = vrcp.pop %v1911
      %v1934 = vrcp.pop %v1914
      %v1935 = vrcp.pop %v1917
      %v1936 = vrcp.pop %v1920
      %v1937 = vrcp.pop %v1923
      %v1938 = vrcp.pop %v1926
      %v1939 = vrcp.pop %v1929
      %v1940 = vmul.f32 %v1890, %v1930
      %v1941 = vmul.f32 %v1891, %v1931
      %v1942 = vmul.f32 %v1892, %v1932
      %v1943 = vmul.f32 %v1893, %v1933
      %v1944 = vmul.f32 %v1894, %v1934
      %v1945 = vmul.f32 %v1895, %v1935
      %v1946 = vmul.f32 %v1896, %v1936
      %v1947 = vmul.f32 %v1897, %v1937
      %v1948 = vmul.f32 %v1898, %v1938
      %v1949 = vmul.f32 %v1899, %v1939
      %1950 = vrot.lane.b32.xlu0 %v343, 104
      %v1951 = vpop.permute.xlu0 %1950
      %1952 = vrot.lane.b32.xlu0 %v348, 104
      %v1953 = vpop.permute.xlu0 %1952
      %1954 = vrot.lane.b32.xlu0 %v353, 104
      %v1955 = vpop.permute.xlu0 %1954
      %1956 = vrot.lane.b32.xlu0 %v358, 104
      %v1957 = vpop.permute.xlu0 %1956
      %1958 = vrot.lane.b32.xlu0 %v363, 104
      %v1959 = vpop.permute.xlu0 %1958
      %1960 = vrot.lane.b32.xlu0 %v368, 104
      %v1961 = vpop.permute.xlu0 %1960
      %1962 = vrot.lane.b32.xlu0 %v373, 104
      %v1963 = vpop.permute.xlu0 %1962
      %1964 = vrot.lane.b32.xlu0 %v378, 104
      %v1965 = vpop.permute.xlu0 %1964
      %1966 = vrot.lane.b32.xlu0 %v383, 104
      %v1967 = vpop.permute.xlu0 %1966
      %1968 = vrot.lane.b32.xlu0 %v388, 104
      %v1969 = vpop.permute.xlu0 %1968
      %v1981 = vsel %vm579, %v1940, 0
      %v1984 = vsel %vm579, %v1941, 0
      %v1987 = vsel %vm579, %v1942, 0
      %v1990 = vsel %vm579, %v1943, 0
      %v1993 = vsel %vm579, %v1944, 0
      %v1996 = vsel %vm579, %v1945, 0
      %v1999 = vsel %vm579, %v1946, 0
      %v2002 = vsel %vm579, %v1947, 0
      %v2005 = vsel %vm579, %v1948, 0
      %v2008 = vsel %vm579, %v1949, 0
      %2010 = vmatprep.subr.mxu0 0.0
      %2011 = vmatpush1.msra.mxu0 0.0
      %2012 = vmatprep.subr.mxu0 0.0
      %2013 = vmatpush1.msra.mxu0 0.0
      %2014 = vmatprep.subr.mxu0 0.0
      %2015 = vmatpush1.msra.mxu0 0.0
      %2016 = vmatprep.subr.mxu0 0.0
      %2017 = vmatpush1.msra.mxu0 0.0
      %2018 = vmatprep.subr.mxu0 0.0
      %2019 = vmatpush1.msra.mxu0 0.0
      %2020 = vmatprep.subr.mxu0 0.0
      %2021 = vmatpush1.msra.mxu0 0.0
      %2022 = vmatprep.subr.mxu0 0.0
      %2023 = vmatpush1.msra.mxu0 %v1969
      %2024 = vmatprep.subr.mxu0 0.0
      %2025 = vmatpush1.msra.mxu0 %v1967
      %2026 = vmatprep.subr.mxu0 0.0
      %2027 = vmatpush1.msra.mxu0 %v1965
      %2028 = vmatprep.subr.mxu0 0.0
      %2029 = vmatpush1.msra.mxu0 %v1963
      %2030 = vmatprep.subr.mxu0 0.0
      %2031 = vmatpush1.msra.mxu0 %v1961
      %2032 = vmatprep.subr.mxu0 0.0
      %2033 = vmatpush1.msra.mxu0 %v1959
      %2034 = vmatprep.subr.mxu0 0.0
      %2035 = vmatpush1.msra.mxu0 %v1957
      %2036 = vmatprep.subr.mxu0 0.0
      %2037 = vmatpush1.msra.mxu0 %v1955
      %2038 = vmatprep.subr.mxu0 0.0
      %2039 = vmatpush1.msra.mxu0 %v1953
      %2040 = vmatprep.subr.mxu0 0.0
      %2041 = vmatpush1.msra.mxu0 %v1951
      %2042 = vmatprep.subr.mxu0 0.0
      %2043 = vmatpush2.msra.mxu0 0.0
      %2044 = vmatprep.subr.mxu0 0.0
      %2045 = vmatpush2.msra.mxu0 0.0
      %2046 = vmatprep.subr.mxu0 0.0
      %2047 = vmatpush2.msra.mxu0 0.0
      %2048 = vmatprep.subr.mxu0 0.0
      %2049 = vmatpush2.msra.mxu0 0.0
      %2050 = vmatprep.subr.mxu0 0.0
      %2051 = vmatpush2.msra.mxu0 0.0
      %2052 = vmatprep.subr.mxu0 0.0
      %2053 = vmatpush2.msra.mxu0 0.0
      %2054 = vmatprep.subr.mxu0 0.0
      %2055 = vmatpush2.msra.mxu0 0.0
      %2056 = vmatprep.subr.mxu0 0.0
      %2057 = vmatpush2.msra.mxu0 0.0
      %2058 = vmatprep.subr.mxu0 0.0
      %2059 = vmatpush2.msra.mxu0 0.0
      %2060 = vmatprep.subr.mxu0 0.0
      %2061 = vmatpush2.msra.mxu0 0.0
      %2062 = vmatprep.subr.mxu0 0.0
      %2063 = vmatpush2.msra.mxu0 0.0
      %2064 = vmatprep.subr.mxu0 0.0
      %2065 = vmatpush2.msra.mxu0 0.0
      %2066 = vmatprep.subr.mxu0 0.0
      %2067 = vmatpush2.msra.mxu0 0.0
      %2068 = vmatprep.subr.mxu0 0.0
      %2069 = vmatpush2.msra.mxu0 0.0
      %2070 = vmatprep.subr.mxu0 0.0
      %2071 = vmatpush2.msra.mxu0 0.0
      %2072 = vmatprep.subr.mxu0 0.0
      %2073 = vmatpush2.msra.mxu0 0.0
      %2074 = vmatprep.mubr.f32.mxu0 0.0
      %2075 = vmatmul.mubr.f32.gmra.mxu0 %v1981
      %v2076 = vpop.f32.mrf.mxu0
      %v2077 = vadd.f32 0.0, %v2076
      %v2078 = vpop.f32.mrf.mxu0
      %2079 = vmatprep.mubr.f32.mxu0 0.0
      %2080 = vmatmul.mubr.f32.gmra.mxu0 %v1984
      %v2081 = vpop.f32.mrf.mxu0
      %v2082 = vadd.f32 0.0, %v2081
      %v2083 = vpop.f32.mrf.mxu0
      %2084 = vmatprep.mubr.f32.mxu0 0.0
      %2085 = vmatmul.mubr.f32.gmra.mxu0 %v1987
      %v2086 = vpop.f32.mrf.mxu0
      %v2087 = vadd.f32 0.0, %v2086
      %v2088 = vpop.f32.mrf.mxu0
      %2089 = vmatprep.mubr.f32.mxu0 0.0
      %2090 = vmatmul.mubr.f32.gmra.mxu0 %v1990
      %v2091 = vpop.f32.mrf.mxu0
      %v2092 = vadd.f32 0.0, %v2091
      %v2093 = vpop.f32.mrf.mxu0
      %2094 = vmatprep.mubr.f32.mxu0 0.0
      %2095 = vmatmul.mubr.f32.gmra.mxu0 %v1993
      %v2096 = vpop.f32.mrf.mxu0
      %v2097 = vadd.f32 0.0, %v2096
      %v2098 = vpop.f32.mrf.mxu0
      %2099 = vmatprep.mubr.f32.mxu0 0.0
      %2100 = vmatmul.mubr.f32.gmra.mxu0 %v1996
      %v2101 = vpop.f32.mrf.mxu0
      %v2102 = vadd.f32 0.0, %v2101
      %v2103 = vpop.f32.mrf.mxu0
      %2104 = vmatprep.mubr.f32.mxu0 0.0
      %2105 = vmatmul.mubr.f32.gmra.mxu0 %v1999
      %v2106 = vpop.f32.mrf.mxu0
      %v2107 = vadd.f32 0.0, %v2106
      %v2108 = vpop.f32.mrf.mxu0
      %2109 = vmatprep.mubr.f32.mxu0 0.0
      %2110 = vmatmul.mubr.f32.gmra.mxu0 %v2002
      %v2111 = vpop.f32.mrf.mxu0
      %v2112 = vadd.f32 0.0, %v2111
      %v2113 = vpop.f32.mrf.mxu0
      %2114 = vmatprep.mubr.f32.mxu0 0.0
      %2115 = vmatmul.mubr.f32.gmra.mxu0 %v2005
      %v2116 = vpop.f32.mrf.mxu0
      %v2117 = vadd.f32 0.0, %v2116
      %v2118 = vpop.f32.mrf.mxu0
      %2119 = vmatprep.mubr.f32.mxu0 0.0
      %2120 = vmatmul.mubr.f32.gmra.mxu0 %v2008
      %v2121 = vpop.f32.mrf.mxu0
      %v2122 = vadd.f32 0.0, %v2121
      %v2123 = vpop.f32.mrf.mxu0
      %2124 = vdwg.mxu0
      %2135 = vrot.lane.b32.xlu0 %v2077, 24
      %v2136 = vpop.permute.xlu0 %2135
      %2137 = vrot.lane.b32.xlu0 %v2082, 24
      %v2138 = vpop.permute.xlu0 %2137
      %2139 = vrot.lane.b32.xlu0 %v2087, 24
      %v2140 = vpop.permute.xlu0 %2139
      %2141 = vrot.lane.b32.xlu0 %v2092, 24
      %v2142 = vpop.permute.xlu0 %2141
      %2143 = vrot.lane.b32.xlu0 %v2097, 24
      %v2144 = vpop.permute.xlu0 %2143
      %2145 = vrot.lane.b32.xlu0 %v2102, 24
      %v2146 = vpop.permute.xlu0 %2145
      %2147 = vrot.lane.b32.xlu0 %v2107, 24
      %v2148 = vpop.permute.xlu0 %2147
      %2149 = vrot.lane.b32.xlu0 %v2112, 24
      %v2150 = vpop.permute.xlu0 %2149
      %2151 = vrot.lane.b32.xlu0 %v2117, 24
      %v2152 = vpop.permute.xlu0 %2151
      %2153 = vrot.lane.b32.xlu0 %v2122, 24
      %v2154 = vpop.permute.xlu0 %2153
      %vm2165 = vcmask 261312
      %2166 = vst.msk [vmem:[#allocation2] sm:$0xff] %vm2165, %v2136
      %2167 = vst.msk [vmem:[#allocation2 + $0x8] sm:$0xff] %vm2165, %v2138
      %2168 = vst.msk [vmem:[#allocation2 + $0x10] sm:$0xff] %vm2165, %v2140
      %2169 = vst.msk [vmem:[#allocation2 + $0x18] sm:$0xff] %vm2165, %v2142
      %2170 = vst.msk [vmem:[#allocation2 + $0x20] sm:$0xff] %vm2165, %v2144
      %2171 = vst.msk [vmem:[#allocation2 + $0x28] sm:$0xff] %vm2165, %v2146
      %2172 = vst.msk [vmem:[#allocation2 + $0x30] sm:$0xff] %vm2165, %v2148
      %2173 = vst.msk [vmem:[#allocation2 + $0x38] sm:$0xff] %vm2165, %v2150
      %2174 = vst.msk [vmem:[#allocation2 + $0x40] sm:$0xff] %vm2165, %v2152
      %2175 = vst.msk [vmem:[#allocation2 + $0x48] sm:$0xff] %vm2165, %v2154
      %v2176 = vld [vmem:[%s2 + $0x10] sm:$0x1]
      %v2177 = vld [vmem:[#allocation2] sm:$0xff]
      %v2178 = vld [vmem:[#allocation2 + $0x8] sm:$0xff]
      %v2179 = vld [vmem:[#allocation2 + $0x10] sm:$0xff]
      %v2180 = vld [vmem:[#allocation2 + $0x18] sm:$0xff]
      %v2181 = vld [vmem:[#allocation2 + $0x20] sm:$0xff]
      %v2182 = vld [vmem:[#allocation2 + $0x28] sm:$0xff]
      %v2183 = vld [vmem:[#allocation2 + $0x30] sm:$0xff]
      %v2184 = vld [vmem:[#allocation2 + $0x38] sm:$0xff]
      %v2185 = vld [vmem:[#allocation2 + $0x40] sm:$0xff]
      %v2186 = vld [vmem:[#allocation2 + $0x48] sm:$0xff]
      %v2187 = vlaneseq
      %v2188 = vshrl.u32 %v2187, 7
      %v2189 = vsub.s32 0, %v2188
      %v2190 = vrot.slane %v2176, %v2189
      %v2191 = vadd.f32 %v2177, %v2190
      %v2192 = vadd.f32 %v2178, %v2190
      %v2193 = vadd.f32 %v2179, %v2190
      %v2194 = vadd.f32 %v2180, %v2190
      %v2195 = vadd.f32 %v2181, %v2190
      %v2196 = vadd.f32 %v2182, %v2190
      %v2197 = vadd.f32 %v2183, %v2190
      %v2198 = vadd.f32 %v2184, %v2190
      %v2199 = vadd.f32 %v2185, %v2190
      %v2200 = vadd.f32 %v2186, %v2190
      %v2201 = vmax.f32 %v2191, 0.0
      %v2202 = vmax.f32 %v2192, 0.0
      %v2203 = vmax.f32 %v2193, 0.0
      %v2204 = vmax.f32 %v2194, 0.0
      %v2205 = vmax.f32 %v2195, 0.0
      %v2206 = vmax.f32 %v2196, 0.0
      %v2207 = vmax.f32 %v2197, 0.0
      %v2208 = vmax.f32 %v2198, 0.0
      %v2209 = vmax.f32 %v2199, 0.0
      %v2210 = vmax.f32 %v2200, 0.0
      %v2211 = vld [vmem:[%s3] sm:$0xff]
      %v2212 = vld [vmem:[%s3 + $0x8] sm:$0xff]
      %v2213 = vld [vmem:[%s3 + $0x10] sm:$0xff]
      %v2214 = vld [vmem:[%s3 + $0x18] sm:$0xff]
      %vm2215 = vcmask 261120
      %v2217 = vsel %vm2215, %v2201, 0
      %v2220 = vsel %vm2215, %v2202, 0
      %v2223 = vsel %vm2215, %v2203, 0
      %v2226 = vsel %vm2215, %v2204, 0
      %v2229 = vsel %vm2215, %v2205, 0
      %v2232 = vsel %vm2215, %v2206, 0
      %v2235 = vsel %vm2215, %v2207, 0
      %v2238 = vsel %vm2215, %v2208, 0
      %v2241 = vsel %vm2215, %v2209, 0
      %v2244 = vsel %vm2215, %v2210, 0
      %2246 = vmatprep.subr.mxu0 0.0
      %2247 = vmatpush1.msra.mxu0 0.0
      %2248 = vmatprep.subr.mxu0 0.0
      %2249 = vmatpush1.msra.mxu0 0.0
      %2250 = vmatprep.subr.mxu0 0.0
      %2251 = vmatpush1.msra.mxu0 0.0
      %2252 = vmatprep.subr.mxu0 0.0
      %2253 = vmatpush1.msra.mxu0 0.0
      %2254 = vmatprep.subr.mxu0 0.0
      %2255 = vmatpush1.msra.mxu0 0.0
      %2256 = vmatprep.subr.mxu0 0.0
      %2257 = vmatpush1.msra.mxu0 0.0
      %2258 = vmatprep.subr.mxu0 0.0
      %2259 = vmatpush1.msra.mxu0 0.0
      %2260 = vmatprep.subr.mxu0 0.0
      %2261 = vmatpush1.msra.mxu0 0.0
      %2262 = vmatprep.subr.mxu0 0.0
      %2263 = vmatpush1.msra.mxu0 0.0
      %2264 = vmatprep.subr.mxu0 0.0
      %2265 = vmatpush1.msra.mxu0 0.0
      %2266 = vmatprep.subr.mxu0 0.0
      %2267 = vmatpush1.msra.mxu0 0.0
      %2268 = vmatprep.subr.mxu0 0.0
      %2269 = vmatpush1.msra.mxu0 0.0
      %2270 = vmatprep.subr.mxu0 0.0
      %2271 = vmatpush1.msra.mxu0 %v2214
      %2272 = vmatprep.subr.mxu0 0.0
      %2273 = vmatpush1.msra.mxu0 %v2213
      %2274 = vmatprep.subr.mxu0 0.0
      %2275 = vmatpush1.msra.mxu0 %v2212
      %2276 = vmatprep.subr.mxu0 0.0
      %2277 = vmatpush1.msra.mxu0 %v2211
      %2278 = vmatprep.subr.mxu0 0.0
      %2279 = vmatpush2.msra.mxu0 0.0
      %2280 = vmatprep.subr.mxu0 0.0
      %2281 = vmatpush2.msra.mxu0 0.0
      %2282 = vmatprep.subr.mxu0 0.0
      %2283 = vmatpush2.msra.mxu0 0.0
      %2284 = vmatprep.subr.mxu0 0.0
      %2285 = vmatpush2.msra.mxu0 0.0
      %2286 = vmatprep.subr.mxu0 0.0
      %2287 = vmatpush2.msra.mxu0 0.0
      %2288 = vmatprep.subr.mxu0 0.0
      %2289 = vmatpush2.msra.mxu0 0.0
      %2290 = vmatprep.subr.mxu0 0.0
      %2291 = vmatpush2.msra.mxu0 0.0
      %2292 = vmatprep.subr.mxu0 0.0
      %2293 = vmatpush2.msra.mxu0 0.0
      %2294 = vmatprep.subr.mxu0 0.0
      %2295 = vmatpush2.msra.mxu0 0.0
      %2296 = vmatprep.subr.mxu0 0.0
      %2297 = vmatpush2.msra.mxu0 0.0
      %2298 = vmatprep.subr.mxu0 0.0
      %2299 = vmatpush2.msra.mxu0 0.0
      %2300 = vmatprep.subr.mxu0 0.0
      %2301 = vmatpush2.msra.mxu0 0.0
      %2302 = vmatprep.subr.mxu0 0.0
      %2303 = vmatpush2.msra.mxu0 0.0
      %2304 = vmatprep.subr.mxu0 0.0
      %2305 = vmatpush2.msra.mxu0 0.0
      %2306 = vmatprep.subr.mxu0 0.0
      %2307 = vmatpush2.msra.mxu0 0.0
      %2308 = vmatprep.subr.mxu0 0.0
      %2309 = vmatpush2.msra.mxu0 0.0
      %2310 = vmatprep.mubr.f32.mxu0 0.0
      %2311 = vmatmul.mubr.f32.gmra.mxu0 %v2217
      %v2312 = vpop.f32.mrf.mxu0
      %v2313 = vadd.f32 0.0, %v2312
      %v2314 = vpop.f32.mrf.mxu0
      %2315 = vmatprep.mubr.f32.mxu0 0.0
      %2316 = vmatmul.mubr.f32.gmra.mxu0 %v2220
      %v2317 = vpop.f32.mrf.mxu0
      %v2318 = vadd.f32 0.0, %v2317
      %v2319 = vpop.f32.mrf.mxu0
      %2320 = vmatprep.mubr.f32.mxu0 0.0
      %2321 = vmatmul.mubr.f32.gmra.mxu0 %v2223
      %v2322 = vpop.f32.mrf.mxu0
      %v2323 = vadd.f32 0.0, %v2322
      %v2324 = vpop.f32.mrf.mxu0
      %2325 = vmatprep.mubr.f32.mxu0 0.0
      %2326 = vmatmul.mubr.f32.gmra.mxu0 %v2226
      %v2327 = vpop.f32.mrf.mxu0
      %v2328 = vadd.f32 0.0, %v2327
      %v2329 = vpop.f32.mrf.mxu0
      %2330 = vmatprep.mubr.f32.mxu0 0.0
      %2331 = vmatmul.mubr.f32.gmra.mxu0 %v2229
      %v2332 = vpop.f32.mrf.mxu0
      %v2333 = vadd.f32 0.0, %v2332
      %v2334 = vpop.f32.mrf.mxu0
      %2335 = vmatprep.mubr.f32.mxu0 0.0
      %2336 = vmatmul.mubr.f32.gmra.mxu0 %v2232
      %v2337 = vpop.f32.mrf.mxu0
      %v2338 = vadd.f32 0.0, %v2337
      %v2339 = vpop.f32.mrf.mxu0
      %2340 = vmatprep.mubr.f32.mxu0 0.0
      %2341 = vmatmul.mubr.f32.gmra.mxu0 %v2235
      %v2342 = vpop.f32.mrf.mxu0
      %v2343 = vadd.f32 0.0, %v2342
      %v2344 = vpop.f32.mrf.mxu0
      %2345 = vmatprep.mubr.f32.mxu0 0.0
      %2346 = vmatmul.mubr.f32.gmra.mxu0 %v2238
      %v2347 = vpop.f32.mrf.mxu0
      %v2348 = vadd.f32 0.0, %v2347
      %v2349 = vpop.f32.mrf.mxu0
      %2350 = vmatprep.mubr.f32.mxu0 0.0
      %2351 = vmatmul.mubr.f32.gmra.mxu0 %v2241
      %v2352 = vpop.f32.mrf.mxu0
      %v2353 = vadd.f32 0.0, %v2352
      %v2354 = vpop.f32.mrf.mxu0
      %2355 = vmatprep.mubr.f32.mxu0 0.0
      %2356 = vmatmul.mubr.f32.gmra.mxu0 %v2244
      %v2357 = vpop.f32.mrf.mxu0
      %v2358 = vadd.f32 0.0, %v2357
      %v2359 = vpop.f32.mrf.mxu0
      %2360 = vdwg.mxu0
      %v2361 = vld [vmem:[%s3 + $0x21] sm:$0x1]
      %v2363 = vsel %vm2215, %v2361, 0
      %2365 = vmatprep.subr.mxu0 0.0
      %2366 = vmatpush1.xpose.msra.mxu0 0.0
      %2367 = vmatprep.subr.mxu0 0.0
      %2368 = vmatpush1.xpose.msra.mxu0 0.0
      %2369 = vmatprep.subr.mxu0 0.0
      %2370 = vmatpush1.xpose.msra.mxu0 0.0
      %2371 = vmatprep.subr.mxu0 0.0
      %2372 = vmatpush1.xpose.msra.mxu0 0.0
      %2373 = vmatprep.subr.mxu0 0.0
      %2374 = vmatpush1.xpose.msra.mxu0 0.0
      %2375 = vmatprep.subr.mxu0 0.0
      %2376 = vmatpush1.xpose.msra.mxu0 0.0
      %2377 = vmatprep.subr.mxu0 0.0
      %2378 = vmatpush1.xpose.msra.mxu0 %v2244
      %2379 = vmatprep.subr.mxu0 0.0
      %2380 = vmatpush1.xpose.msra.mxu0 %v2241
      %2381 = vmatprep.subr.mxu0 0.0
      %2382 = vmatpush1.xpose.msra.mxu0 %v2238
      %2383 = vmatprep.subr.mxu0 0.0
      %2384 = vmatpush1.xpose.msra.mxu0 %v2235
      %2385 = vmatprep.subr.mxu0 0.0
      %2386 = vmatpush1.xpose.msra.mxu0 %v2232
      %2387 = vmatprep.subr.mxu0 0.0
      %2388 = vmatpush1.xpose.msra.mxu0 %v2229
      %2389 = vmatprep.subr.mxu0 0.0
      %2390 = vmatpush1.xpose.msra.mxu0 %v2226
      %2391 = vmatprep.subr.mxu0 0.0
      %2392 = vmatpush1.xpose.msra.mxu0 %v2223
      %2393 = vmatprep.subr.mxu0 0.0
      %2394 = vmatpush1.xpose.msra.mxu0 %v2220
      %2395 = vmatprep.subr.mxu0 0.0
      %2396 = vmatpush1.xpose.msra.mxu0 %v2217
      %2397 = vmatprep.subr.mxu0 0.0
      %2398 = vmatpush2.xpose.msra.mxu0 0.0
      %2399 = vmatprep.subr.mxu0 0.0
      %2400 = vmatpush2.xpose.msra.mxu0 0.0
      %2401 = vmatprep.subr.mxu0 0.0
      %2402 = vmatpush2.xpose.msra.mxu0 0.0
      %2403 = vmatprep.subr.mxu0 0.0
      %2404 = vmatpush2.xpose.msra.mxu0 0.0
      %2405 = vmatprep.subr.mxu0 0.0
      %2406 = vmatpush2.xpose.msra.mxu0 0.0
      %2407 = vmatprep.subr.mxu0 0.0
      %2408 = vmatpush2.xpose.msra.mxu0 0.0
      %2409 = vmatprep.subr.mxu0 0.0
      %2410 = vmatpush2.xpose.msra.mxu0 0.0
      %2411 = vmatprep.subr.mxu0 0.0
      %2412 = vmatpush2.xpose.msra.mxu0 0.0
      %2413 = vmatprep.subr.mxu0 0.0
      %2414 = vmatpush2.xpose.msra.mxu0 0.0
      %2415 = vmatprep.subr.mxu0 0.0
      %2416 = vmatpush2.xpose.msra.mxu0 0.0
      %2417 = vmatprep.subr.mxu0 0.0
      %2418 = vmatpush2.xpose.msra.mxu0 0.0
      %2419 = vmatprep.subr.mxu0 0.0
      %2420 = vmatpush2.xpose.msra.mxu0 0.0
      %2421 = vmatprep.subr.mxu0 0.0
      %2422 = vmatpush2.xpose.msra.mxu0 0.0
      %2423 = vmatprep.subr.mxu0 0.0
      %2424 = vmatpush2.xpose.msra.mxu0 0.0
      %2425 = vmatprep.subr.mxu0 0.0
      %2426 = vmatpush2.xpose.msra.mxu0 0.0
      %2427 = vmatprep.subr.mxu0 0.0
      %2428 = vmatpush2.xpose.msra.mxu0 0.0
      %2429 = vmatprep.mubr.f32.mxu0 0.0
      %2430 = vmatmul.mubr.f32.gmra.mxu0 %v2363
      %v2431 = vpop.f32.mrf.mxu0
      %v2432 = vadd.f32 0.0, %v2431
      %v2433 = vpop.f32.mrf.mxu0
      %2434 = vdwg.mxu0
      %2436 = vset.pattern.permute.xlu0 8
      %2437 = vperm.xlu0 %2436, %v2313
      %v2438 = vpop.permute.xlu0 %2437
      %2441 = vset.pattern.permute.xlu0 8
      %2442 = vperm.xlu0 %2441, %v2318
      %v2443 = vpop.permute.xlu0 %2442
      %2446 = vset.pattern.permute.xlu0 8
      %2447 = vperm.xlu0 %2446, %v2323
      %v2448 = vpop.permute.xlu0 %2447
      %2451 = vset.pattern.permute.xlu0 8
      %2452 = vperm.xlu0 %2451, %v2328
      %v2453 = vpop.permute.xlu0 %2452
      %2456 = vset.pattern.permute.xlu0 8
      %2457 = vperm.xlu0 %2456, %v2333
      %v2458 = vpop.permute.xlu0 %2457
      %2461 = vset.pattern.permute.xlu0 8
      %2462 = vperm.xlu0 %2461, %v2338
      %v2463 = vpop.permute.xlu0 %2462
      %2466 = vset.pattern.permute.xlu0 8
      %2467 = vperm.xlu0 %2466, %v2343
      %v2468 = vpop.permute.xlu0 %2467
      %2471 = vset.pattern.permute.xlu0 8
      %2472 = vperm.xlu0 %2471, %v2348
      %v2473 = vpop.permute.xlu0 %2472
      %2476 = vset.pattern.permute.xlu0 8
      %2477 = vperm.xlu0 %2476, %v2353
      %v2478 = vpop.permute.xlu0 %2477
      %2481 = vset.pattern.permute.xlu0 8
      %2482 = vperm.xlu0 %2481, %v2358
      %v2483 = vpop.permute.xlu0 %2482
      %v2485 = vlaneseq
      %v2486 = vshrl.u32 %v2485, 7
      %v2487 = vsub.s32 0, %v2486
      %v2488 = vrot.slane %v2432, %v2487
      %v2489 = vadd.f32 %v2438, %v2488
      %v2490 = vadd.f32 %v2443, %v2488
      %v2491 = vadd.f32 %v2448, %v2488
      %v2492 = vadd.f32 %v2453, %v2488
      %v2493 = vadd.f32 %v2458, %v2488
      %v2494 = vadd.f32 %v2463, %v2488
      %v2495 = vadd.f32 %v2468, %v2488
      %v2496 = vadd.f32 %v2473, %v2488
      %v2497 = vadd.f32 %v2478, %v2488
      %v2498 = vadd.f32 %v2483, %v2488
      %vm2499 = vcmp.gt.f32.partialorder %v2489, 0.0
      %vm2500 = vcmp.gt.f32.partialorder %v2490, 0.0
      %vm2501 = vcmp.gt.f32.partialorder %v2491, 0.0
      %vm2502 = vcmp.gt.f32.partialorder %v2492, 0.0
      %vm2503 = vcmp.gt.f32.partialorder %v2493, 0.0
      %vm2504 = vcmp.gt.f32.partialorder %v2494, 0.0
      %vm2505 = vcmp.gt.f32.partialorder %v2495, 0.0
      %vm2506 = vcmp.gt.f32.partialorder %v2496, 0.0
      %vm2507 = vcmp.gt.f32.partialorder %v2497, 0.0
      %vm2508 = vcmp.gt.f32.partialorder %v2498, 0.0
      %v2509 = vmul.f32 %v2489, 0.2
      %v2510 = vmul.f32 %v2490, 0.2
      %v2511 = vmul.f32 %v2491, 0.2
      %v2512 = vmul.f32 %v2492, 0.2
      %v2513 = vmul.f32 %v2493, 0.2
      %v2514 = vmul.f32 %v2494, 0.2
      %v2515 = vmul.f32 %v2495, 0.2
      %v2516 = vmul.f32 %v2496, 0.2
      %v2517 = vmul.f32 %v2497, 0.2
      %v2518 = vmul.f32 %v2498, 0.2
      %v2519 = vsel %vm2499, %v2489, %v2509
      %v2520 = vsel %vm2500, %v2490, %v2510
      %v2521 = vsel %vm2501, %v2491, %v2511
      %v2522 = vsel %vm2502, %v2492, %v2512
      %v2523 = vsel %vm2503, %v2493, %v2513
      %v2524 = vsel %vm2504, %v2494, %v2514
      %v2525 = vsel %vm2505, %v2495, %v2515
      %v2526 = vsel %vm2506, %v2496, %v2516
      %v2527 = vsel %vm2507, %v2497, %v2517
      %v2528 = vsel %vm2508, %v2498, %v2518
      %v2529 = vsel %vm559, %v2519, -1e+30
      %v2530 = vsel %vm560, %v2520, -1e+30
      %v2531 = vsel %vm561, %v2521, -1e+30
      %v2532 = vsel %vm562, %v2522, -1e+30
      %v2533 = vsel %vm563, %v2523, -1e+30
      %v2534 = vsel %vm564, %v2524, -1e+30
      %v2535 = vsel %vm565, %v2525, -1e+30
      %v2536 = vsel %vm566, %v2526, -1e+30
      %v2537 = vsel %vm567, %v2527, -1e+30
      %v2538 = vsel %vm568, %v2528, -1e+30
      %v2539 = vsel %vm579, %v2529, -inf
      %2540 = vmax.xlane.f32.xlu0 %v2539
      %v2541 = vpop.xlane.xlu0 %2540
      %v2542 = vsel %vm579, %v2530, -inf
      %2543 = vmax.xlane.f32.xlu0 %v2542
      %v2544 = vpop.xlane.xlu0 %2543
      %v2545 = vsel %vm579, %v2531, -inf
      %2546 = vmax.xlane.f32.xlu0 %v2545
      %v2547 = vpop.xlane.xlu0 %2546
      %v2548 = vsel %vm579, %v2532, -inf
      %2549 = vmax.xlane.f32.xlu0 %v2548
      %v2550 = vpop.xlane.xlu0 %2549
      %v2551 = vsel %vm579, %v2533, -inf
      %2552 = vmax.xlane.f32.xlu0 %v2551
      %v2553 = vpop.xlane.xlu0 %2552
      %v2554 = vsel %vm579, %v2534, -inf
      %2555 = vmax.xlane.f32.xlu0 %v2554
      %v2556 = vpop.xlane.xlu0 %2555
      %v2557 = vsel %vm579, %v2535, -inf
      %2558 = vmax.xlane.f32.xlu0 %v2557
      %v2559 = vpop.xlane.xlu0 %2558
      %v2560 = vsel %vm579, %v2536, -inf
      %2561 = vmax.xlane.f32.xlu0 %v2560
      %v2562 = vpop.xlane.xlu0 %2561
      %v2563 = vsel %vm579, %v2537, -inf
      %2564 = vmax.xlane.f32.xlu0 %v2563
      %v2565 = vpop.xlane.xlu0 %2564
      %v2566 = vsel %vm579, %v2538, -inf
      %2567 = vmax.xlane.f32.xlu0 %v2566
      %v2568 = vpop.xlane.xlu0 %2567
      %v2569 = vsub.f32 %v2529, %v2541
      %v2570 = vsub.f32 %v2530, %v2544
      %v2571 = vsub.f32 %v2531, %v2547
      %v2572 = vsub.f32 %v2532, %v2550
      %v2573 = vsub.f32 %v2533, %v2553
      %v2574 = vsub.f32 %v2534, %v2556
      %v2575 = vsub.f32 %v2535, %v2559
      %v2576 = vsub.f32 %v2536, %v2562
      %v2577 = vsub.f32 %v2537, %v2565
      %v2578 = vsub.f32 %v2538, %v2568
      %v2579 = vmul.f32 %v2569, 1.442695
      %v2580 = vpow.pop %v2579
      %v2581 = vmul.f32 %v2570, 1.442695
      %v2582 = vpow.pop %v2581
      %v2583 = vmul.f32 %v2571, 1.442695
      %v2584 = vpow.pop %v2583
      %v2585 = vmul.f32 %v2572, 1.442695
      %v2586 = vpow.pop %v2585
      %v2587 = vmul.f32 %v2573, 1.442695
      %v2588 = vpow.pop %v2587
      %v2589 = vmul.f32 %v2574, 1.442695
      %v2590 = vpow.pop %v2589
      %v2591 = vmul.f32 %v2575, 1.442695
      %v2592 = vpow.pop %v2591
      %v2593 = vmul.f32 %v2576, 1.442695
      %v2594 = vpow.pop %v2593
      %v2595 = vmul.f32 %v2577, 1.442695
      %v2596 = vpow.pop %v2595
      %v2597 = vmul.f32 %v2578, 1.442695
      %v2598 = vpow.pop %v2597
      %v2599 = vmul.f32 %v2580, %v233
      %v2600 = vmul.f32 %v2582, %v234
      %v2601 = vmul.f32 %v2584, %v235
      %v2602 = vmul.f32 %v2586, %v236
      %v2603 = vmul.f32 %v2588, %v237
      %v2604 = vmul.f32 %v2590, %v238
      %v2605 = vmul.f32 %v2592, %v239
      %v2606 = vmul.f32 %v2594, %v240
      %v2607 = vmul.f32 %v2596, %v241
      %v2608 = vmul.f32 %v2598, %v242
      %v2609 = vsel %vm579, %v2599, 0.0
      %2610 = vadd.xlane.f32.xlu0 %v2609
      %v2611 = vpop.xlane.xlu0 %2610
      %v2612 = vsel %vm579, %v2600, 0.0
      %2613 = vadd.xlane.f32.xlu0 %v2612
      %v2614 = vpop.xlane.xlu0 %2613
      %v2615 = vsel %vm579, %v2601, 0.0
      %2616 = vadd.xlane.f32.xlu0 %v2615
      %v2617 = vpop.xlane.xlu0 %2616
      %v2618 = vsel %vm579, %v2602, 0.0
      %2619 = vadd.xlane.f32.xlu0 %v2618
      %v2620 = vpop.xlane.xlu0 %2619
      %v2621 = vsel %vm579, %v2603, 0.0
      %2622 = vadd.xlane.f32.xlu0 %v2621
      %v2623 = vpop.xlane.xlu0 %2622
      %v2624 = vsel %vm579, %v2604, 0.0
      %2625 = vadd.xlane.f32.xlu0 %v2624
      %v2626 = vpop.xlane.xlu0 %2625
      %v2627 = vsel %vm579, %v2605, 0.0
      %2628 = vadd.xlane.f32.xlu0 %v2627
      %v2629 = vpop.xlane.xlu0 %2628
      %v2630 = vsel %vm579, %v2606, 0.0
      %2631 = vadd.xlane.f32.xlu0 %v2630
      %v2632 = vpop.xlane.xlu0 %2631
      %v2633 = vsel %vm579, %v2607, 0.0
      %2634 = vadd.xlane.f32.xlu0 %v2633
      %v2635 = vpop.xlane.xlu0 %2634
      %v2636 = vsel %vm579, %v2608, 0.0
      %2637 = vadd.xlane.f32.xlu0 %v2636
      %v2638 = vpop.xlane.xlu0 %2637
      %v2639 = vrcp.pop %v2611
      %v2640 = vrcp.pop %v2614
      %v2641 = vrcp.pop %v2617
      %v2642 = vrcp.pop %v2620
      %v2643 = vrcp.pop %v2623
      %v2644 = vrcp.pop %v2626
      %v2645 = vrcp.pop %v2629
      %v2646 = vrcp.pop %v2632
      %v2647 = vrcp.pop %v2635
      %v2648 = vrcp.pop %v2638
      %v2649 = vmul.f32 %v2599, %v2639
      %v2650 = vmul.f32 %v2600, %v2640
      %v2651 = vmul.f32 %v2601, %v2641
      %v2652 = vmul.f32 %v2602, %v2642
      %v2653 = vmul.f32 %v2603, %v2643
      %v2654 = vmul.f32 %v2604, %v2644
      %v2655 = vmul.f32 %v2605, %v2645
      %v2656 = vmul.f32 %v2606, %v2646
      %v2657 = vmul.f32 %v2607, %v2647
      %v2658 = vmul.f32 %v2608, %v2648
      %v2659 = vld [vmem:[%s3 + $0x20] sm:$0x1]
      %v2660 = vlaneseq
      %v2661 = vshrl.u32 %v2660, 7
      %v2662 = vsub.s32 0, %v2661
      %v2663 = vrot.slane %v2659, %v2662
      %v2665 = vsel %vm579, %v2649, 0
      %v2668 = vsel %vm579, %v2650, 0
      %v2671 = vsel %vm579, %v2651, 0
      %v2674 = vsel %vm579, %v2652, 0
      %v2677 = vsel %vm579, %v2653, 0
      %v2680 = vsel %vm579, %v2654, 0
      %v2683 = vsel %vm579, %v2655, 0
      %v2686 = vsel %vm579, %v2656, 0
      %v2689 = vsel %vm579, %v2657, 0
      %v2692 = vsel %vm579, %v2658, 0
      %2694 = vmatprep.subr.mxu0 0.0
      %2695 = vmatpush1.msra.mxu0 0.0
      %2696 = vmatprep.subr.mxu0 0.0
      %2697 = vmatpush1.msra.mxu0 0.0
      %2698 = vmatprep.subr.mxu0 0.0
      %2699 = vmatpush1.msra.mxu0 0.0
      %2700 = vmatprep.subr.mxu0 0.0
      %2701 = vmatpush1.msra.mxu0 0.0
      %2702 = vmatprep.subr.mxu0 0.0
      %2703 = vmatpush1.msra.mxu0 0.0
      %2704 = vmatprep.subr.mxu0 0.0
      %2705 = vmatpush1.msra.mxu0 0.0
      %2706 = vmatprep.subr.mxu0 0.0
      %2707 = vmatpush1.msra.mxu0 %v2358
      %2708 = vmatprep.subr.mxu0 0.0
      %2709 = vmatpush1.msra.mxu0 %v2353
      %2710 = vmatprep.subr.mxu0 0.0
      %2711 = vmatpush1.msra.mxu0 %v2348
      %2712 = vmatprep.subr.mxu0 0.0
      %2713 = vmatpush1.msra.mxu0 %v2343
      %2714 = vmatprep.subr.mxu0 0.0
      %2715 = vmatpush1.msra.mxu0 %v2338
      %2716 = vmatprep.subr.mxu0 0.0
      %2717 = vmatpush1.msra.mxu0 %v2333
      %2718 = vmatprep.subr.mxu0 0.0
      %2719 = vmatpush1.msra.mxu0 %v2328
      %2720 = vmatprep.subr.mxu0 0.0
      %2721 = vmatpush1.msra.mxu0 %v2323
      %2722 = vmatprep.subr.mxu0 0.0
      %2723 = vmatpush1.msra.mxu0 %v2318
      %2724 = vmatprep.subr.mxu0 0.0
      %2725 = vmatpush1.msra.mxu0 %v2313
      %2726 = vmatprep.subr.mxu0 0.0
      %2727 = vmatpush2.msra.mxu0 0.0
      %2728 = vmatprep.subr.mxu0 0.0
      %2729 = vmatpush2.msra.mxu0 0.0
      %2730 = vmatprep.subr.mxu0 0.0
      %2731 = vmatpush2.msra.mxu0 0.0
      %2732 = vmatprep.subr.mxu0 0.0
      %2733 = vmatpush2.msra.mxu0 0.0
      %2734 = vmatprep.subr.mxu0 0.0
      %2735 = vmatpush2.msra.mxu0 0.0
      %2736 = vmatprep.subr.mxu0 0.0
      %2737 = vmatpush2.msra.mxu0 0.0
      %2738 = vmatprep.subr.mxu0 0.0
      %2739 = vmatpush2.msra.mxu0 0.0
      %2740 = vmatprep.subr.mxu0 0.0
      %2741 = vmatpush2.msra.mxu0 0.0
      %2742 = vmatprep.subr.mxu0 0.0
      %2743 = vmatpush2.msra.mxu0 0.0
      %2744 = vmatprep.subr.mxu0 0.0
      %2745 = vmatpush2.msra.mxu0 0.0
      %2746 = vmatprep.subr.mxu0 0.0
      %2747 = vmatpush2.msra.mxu0 0.0
      %2748 = vmatprep.subr.mxu0 0.0
      %2749 = vmatpush2.msra.mxu0 0.0
      %2750 = vmatprep.subr.mxu0 0.0
      %2751 = vmatpush2.msra.mxu0 0.0
      %2752 = vmatprep.subr.mxu0 0.0
      %2753 = vmatpush2.msra.mxu0 0.0
      %2754 = vmatprep.subr.mxu0 0.0
      %2755 = vmatpush2.msra.mxu0 0.0
      %2756 = vmatprep.subr.mxu0 0.0
      %2757 = vmatpush2.msra.mxu0 0.0
      %2758 = vmatprep.mubr.f32.mxu0 0.0
      %2759 = vmatmul.mubr.f32.gmra.mxu0 %v2665
      %v2760 = vpop.f32.mrf.mxu0
      %v2761 = vadd.f32 %v2663, %v2760
      %v2762 = vpop.f32.mrf.mxu0
      %2763 = vmatprep.mubr.f32.mxu0 0.0
      %2764 = vmatmul.mubr.f32.gmra.mxu0 %v2668
      %v2765 = vpop.f32.mrf.mxu0
      %v2766 = vadd.f32 %v2663, %v2765
      %v2767 = vpop.f32.mrf.mxu0
      %2768 = vmatprep.mubr.f32.mxu0 0.0
      %2769 = vmatmul.mubr.f32.gmra.mxu0 %v2671
      %v2770 = vpop.f32.mrf.mxu0
      %v2771 = vadd.f32 %v2663, %v2770
      %v2772 = vpop.f32.mrf.mxu0
      %2773 = vmatprep.mubr.f32.mxu0 0.0
      %2774 = vmatmul.mubr.f32.gmra.mxu0 %v2674
      %v2775 = vpop.f32.mrf.mxu0
      %v2776 = vadd.f32 %v2663, %v2775
      %v2777 = vpop.f32.mrf.mxu0
      %2778 = vmatprep.mubr.f32.mxu0 0.0
      %2779 = vmatmul.mubr.f32.gmra.mxu0 %v2677
      %v2780 = vpop.f32.mrf.mxu0
      %v2781 = vadd.f32 %v2663, %v2780
      %v2782 = vpop.f32.mrf.mxu0
      %2783 = vmatprep.mubr.f32.mxu0 0.0
      %2784 = vmatmul.mubr.f32.gmra.mxu0 %v2680
      %v2785 = vpop.f32.mrf.mxu0
      %v2786 = vadd.f32 %v2663, %v2785
      %v2787 = vpop.f32.mrf.mxu0
      %2788 = vmatprep.mubr.f32.mxu0 0.0
      %2789 = vmatmul.mubr.f32.gmra.mxu0 %v2683
      %v2790 = vpop.f32.mrf.mxu0
      %v2791 = vadd.f32 %v2663, %v2790
      %v2792 = vpop.f32.mrf.mxu0
      %2793 = vmatprep.mubr.f32.mxu0 0.0
      %2794 = vmatmul.mubr.f32.gmra.mxu0 %v2686
      %v2795 = vpop.f32.mrf.mxu0
      %v2796 = vadd.f32 %v2663, %v2795
      %v2797 = vpop.f32.mrf.mxu0
      %2798 = vmatprep.mubr.f32.mxu0 0.0
      %2799 = vmatmul.mubr.f32.gmra.mxu0 %v2689
      %v2800 = vpop.f32.mrf.mxu0
      %v2801 = vadd.f32 %v2663, %v2800
      %v2802 = vpop.f32.mrf.mxu0
      %2803 = vmatprep.mubr.f32.mxu0 0.0
      %2804 = vmatmul.mubr.f32.gmra.mxu0 %v2692
      %v2805 = vpop.f32.mrf.mxu0
      %v2806 = vadd.f32 %v2663, %v2805
      %v2807 = vpop.f32.mrf.mxu0
      %2808 = vdwg.mxu0
      %v2809 = vlaneseq
      %v2810 = vshrl.u32 %v2809, 7
      %v2811 = vadd.s32 %v2810, 8
      %v2812 = vlaneseq
      %v2813 = vand.u32 %v2812, 127
      %v2814 = vmul.u32 %v2810, 5
      %v2815 = vmul.u32 %v2811, 5
      %vm2816 = vcmp.ge.s32.totalorder %v2813, %v2814
      %vm2817 = vcmp.ge.s32.totalorder %v2813, %v2815
      %v2818 = vadd.s32 %v2814, 5
      %v2819 = vadd.s32 %v2815, 5
      %vm2820 = vcmp.lt.s32.totalorder %v2813, %v2818
      %vm2821 = vcmp.lt.s32.totalorder %v2813, %v2819
      %vm2822 = vmand %vm2816, %vm2820
      %vm2823 = vmand %vm2817, %vm2821
      %v2824 = vsel %vm2822, 1, 0
      %v2825 = vsel %vm2823, 1, 0
      %v2826 = vcvt.s32.f32 %v2824
      %v2827 = vcvt.s32.f32 %v2825
      %v2828 = vmul.f32 %v2826, 0.2
      %v2829 = vmul.f32 %v2827, 0.2
      %v2831 = vsel %vm579, %v2828, 0
      %v2834 = vsel %vm579, %v2829, 0
      %2836 = vmatprep.subr.mxu0 0.0
      %2837 = vmatpush1.msra.mxu0 0.0
      %2838 = vmatprep.subr.mxu0 0.0
      %2839 = vmatpush1.msra.mxu0 0.0
      %2840 = vmatprep.subr.mxu0 0.0
      %2841 = vmatpush1.msra.mxu0 0.0
      %2842 = vmatprep.subr.mxu0 0.0
      %2843 = vmatpush1.msra.mxu0 0.0
      %2844 = vmatprep.subr.mxu0 0.0
      %2845 = vmatpush1.msra.mxu0 0.0
      %2846 = vmatprep.subr.mxu0 0.0
      %2847 = vmatpush1.msra.mxu0 0.0
      %2848 = vmatprep.subr.mxu0 0.0
      %2849 = vmatpush1.msra.mxu0 %v2806
      %2850 = vmatprep.subr.mxu0 0.0
      %2851 = vmatpush1.msra.mxu0 %v2801
      %2852 = vmatprep.subr.mxu0 0.0
      %2853 = vmatpush1.msra.mxu0 %v2796
      %2854 = vmatprep.subr.mxu0 0.0
      %2855 = vmatpush1.msra.mxu0 %v2791
      %2856 = vmatprep.subr.mxu0 0.0
      %2857 = vmatpush1.msra.mxu0 %v2786
      %2858 = vmatprep.subr.mxu0 0.0
      %2859 = vmatpush1.msra.mxu0 %v2781
      %2860 = vmatprep.subr.mxu0 0.0
      %2861 = vmatpush1.msra.mxu0 %v2776
      %2862 = vmatprep.subr.mxu0 0.0
      %2863 = vmatpush1.msra.mxu0 %v2771
      %2864 = vmatprep.subr.mxu0 0.0
      %2865 = vmatpush1.msra.mxu0 %v2766
      %2866 = vmatprep.subr.mxu0 0.0
      %2867 = vmatpush1.msra.mxu0 %v2761
      %2868 = vmatprep.subr.mxu0 0.0
      %2869 = vmatpush2.msra.mxu0 0.0
      %2870 = vmatprep.subr.mxu0 0.0
      %2871 = vmatpush2.msra.mxu0 0.0
      %2872 = vmatprep.subr.mxu0 0.0
      %2873 = vmatpush2.msra.mxu0 0.0
      %2874 = vmatprep.subr.mxu0 0.0
      %2875 = vmatpush2.msra.mxu0 0.0
      %2876 = vmatprep.subr.mxu0 0.0
      %2877 = vmatpush2.msra.mxu0 0.0
      %2878 = vmatprep.subr.mxu0 0.0
      %2879 = vmatpush2.msra.mxu0 0.0
      %2880 = vmatprep.subr.mxu0 0.0
      %2881 = vmatpush2.msra.mxu0 0.0
      %2882 = vmatprep.subr.mxu0 0.0
      %2883 = vmatpush2.msra.mxu0 0.0
      %2884 = vmatprep.subr.mxu0 0.0
      %2885 = vmatpush2.msra.mxu0 0.0
      %2886 = vmatprep.subr.mxu0 0.0
      %2887 = vmatpush2.msra.mxu0 0.0
      %2888 = vmatprep.subr.mxu0 0.0
      %2889 = vmatpush2.msra.mxu0 0.0
      %2890 = vmatprep.subr.mxu0 0.0
      %2891 = vmatpush2.msra.mxu0 0.0
      %2892 = vmatprep.subr.mxu0 0.0
      %2893 = vmatpush2.msra.mxu0 0.0
      %2894 = vmatprep.subr.mxu0 0.0
      %2895 = vmatpush2.msra.mxu0 0.0
      %2896 = vmatprep.subr.mxu0 0.0
      %2897 = vmatpush2.msra.mxu0 0.0
      %2898 = vmatprep.subr.mxu0 0.0
      %2899 = vmatpush2.msra.mxu0 0.0
      %2900 = vmatprep.mubr.f32.mxu0 0.0
      %2901 = vmatmul.mubr.f32.gmra.mxu0 %v2831
      %v2902 = vpop.f32.mrf.mxu0
      %v2903 = vadd.f32 0.0, %v2902
      %v2904 = vpop.f32.mrf.mxu0
      %2905 = vmatprep.mubr.f32.mxu0 0.0
      %2906 = vmatmul.mubr.f32.gmra.mxu0 %v2834
      %v2907 = vpop.f32.mrf.mxu0
      %v2908 = vadd.f32 0.0, %v2907
      %v2909 = vpop.f32.mrf.mxu0
      %2910 = vdwg.mxu0
      %2911 = vst.msk [vmem:[%s221] sm:$0xff] %vm845, %v2903
      %2912 = vst.msk [vmem:[%s221 + $0x8] sm:$0xff] %vm845, %v2908
      %s2913 = smul.u32 2, %s15
      %p2914 = scmp.lt.s32.totalorder %s2913, 7
      %s2915 = scalar_select %p2914, %s2913, 7
      %s2916 = smul.addr %s2915, 8
      %s2917 = scalar_lea.vmem %s4, %s2916
      // Predicated region
      $region37: #{tpu_custom_call.1} parent=35 // pred_check
        %p2918 = pneg %p127
      $region38: #{tpu_custom_call.1} parent=35 // pred_check_branch
        %2920 = sbr.rel (%p2918) target = $region40
      $region39: #{tpu_custom_call.1} parent=35 // pred_region
        %s2921 = smul.u32 2, %s15
      $region40: #{tpu_custom_call.1} parent=35 // pred_fallthru
        _
    $region36: #{tpu_custom_call.1} parent=5 // pred_fallthru
      _
    %p2922 = scmp.le.s32.totalorder 2, %s10
    // Predicated region
    $region41: #{tpu_custom_call.1} parent=5 // pred_check
      %p2923 = pneg %p2922
    $region42: #{tpu_custom_call.1} parent=5 // pred_check_branch
      %2925 = sbr.rel (%p2923) target = $region44
    $region43: #{tpu_custom_call.1} parent=5 // pred_region
      %s2926 = ssub.s32 %s10, 2
      // Predicated region
      $region45: #{tpu_custom_call.1} parent=43 // pred_check
        %p2927 = pneg %p133
      $region46: #{tpu_custom_call.1} parent=43 // pred_check_branch
        %2929 = sbr.rel (%p2927) target = $region48
      $region47: #{tpu_custom_call.1} parent=43 // pred_region
        %s2930 = smul.u32 2, %s16
        %p2931 = scmp.lt.s32.totalorder %s2930, 7
        %s2932 = scalar_select %p2931, %s2930, 7
        %s2933 = smul.addr %s2932, 8
        %s2934 = scalar_lea.vmem %s4, %s2933
      $region48: #{tpu_custom_call.1} parent=43 // pred_fallthru
        _
    $region44: #{tpu_custom_call.1} parent=5 // pred_fallthru
      _
  $region6: #{tpu_custom_call.1} parent=0 // loop_footer
    %s14 = sadd.s32 1, %s10
  $region7: #{tpu_custom_call.1} parent=0 // loop_footer_branch
    %9 = sbr.rel target = $region3
  $region8: #{tpu_custom_call.1} parent=0 // loop_exit
    _

</llo_original>
